<compile_context>
chip_gen: v7x
topology: tpu7x:2x2x1
jax: 0.10.0
libtpu: 0.0.40
codegen_flags: <defaults>
</compile_context>

<pallas_src>
import functools

import numpy as np
import jax
import jax.numpy as jnp
from jax.experimental import pallas as pl
from jax.experimental.pallas import tpu as pltpu

KSIZE = 7
PAD = (KSIZE - 1) // 2
_MIB = 1024 * 1024


def _spatial_gate_kernel(w_ref, mask_ref, x_ref, y_ref, scale_ref, *, W):
    # w_ref     : SMEM (2*49 + 1,) f32   BN-folded conv weights (max-ch, mean-ch) + folded bias
    # mask_ref  : VMEM (14, HWp)   f32   rows 0..6 = row-validity per dy, rows 7..13 = col-validity per dx
    # x_ref     : VMEM (nb, C, HWp)      input block, H*W lane-dense (lane / batch tails may be ragged)
    # y_ref     : VMEM (nb, C, HWp)      x * scale
    # scale_ref : VMEM (nb, 1, HWp) f32  sigmoid spatial attention map
    nb, C, HWp = x_ref.shape
    K = KSIZE

    # ChannelPool (reduction over C), lane-dense.  max is exact in the I/O dtype;
    # the mean accumulates in f32.  Only the small pooled (nb, HWp) maps live in f32.
    cmax = jnp.max(x_ref[...], axis=1).astype(jnp.float32)                  # (nb, HWp)
    cmean = jnp.sum(x_ref[...].astype(jnp.float32), axis=1) * (1.0 / C)     # (nb, HWp)

    # 7x7 "same" conv (2 -> 1 channels) on the flattened map, factored into two passes.
    # Vertical pass: for each dy, one lane-roll by (dy-PAD)*W per pooled map (14 rolls),
    # row-mask applied once, folded into 7 per-column partial sums (98 scalar FMAs).
    # Masking uses selects (not multiplies) so garbage in ragged pad lanes can never
    # propagate (0 * NaN) into valid lanes; valid lanes never read pad lanes through
    # an unmasked tap.  Row-masking at the pre-horizontal-roll position is exact
    # because the column mask kills every tap where the row could differ.
    col_acc = [jnp.zeros((nb, HWp), jnp.float32) for _ in range(K)]
    for dy in range(K):
        shift_v = (-(dy - PAD) * W) % HWp
        a_max = pltpu.roll(cmax, shift_v, 1) if shift_v else cmax
        a_mean = pltpu.roll(cmean, shift_v, 1) if shift_v else cmean
        hmask = mask_ref[dy:dy + 1, :] > 0.5                                 # (1, HWp) bool
        a_max = jnp.where(hmask, a_max, 0.0)
        a_mean = jnp.where(hmask, a_mean, 0.0)
        for dx in range(K):
            col_acc[dx] = (col_acc[dx]
                           + w_ref[dy * K + dx] * a_max                      # channel 0 = max
                           + w_ref[K * K + dy * K + dx] * a_mean)            # channel 1 = mean

    # Horizontal pass: one lane-roll by (dx-PAD) + column mask + accumulate per dx (7 rolls).
    acc = jnp.zeros((nb, HWp), jnp.float32)
    for dx in range(K):
        shift_h = (-(dx - PAD)) % HWp
        t = pltpu.roll(col_acc[dx], shift_h, 1) if shift_h else col_acc[dx]
        wmask = mask_ref[K + dx:K + dx + 1, :] > 0.5                         # (1, HWp) bool
        acc = acc + jnp.where(wmask, t, 0.0)

    scale = jax.nn.sigmoid(acc + w_ref[2 * K * K])                           # folded BN bias; (nb, HWp) f32

    # Lane-dense full-width stores; gate multiply stays in the native I/O dtype.
    scale_ref[...] = scale[:, None, :]
    y_ref[...] = (x_ref[...] * scale[:, None, :].astype(x_ref.dtype)).astype(y_ref.dtype)


def spatial_gate(x, conv_w, bn_gamma, bn_beta, bn_mean, bn_var, eps=1e-5):
    """x: (N, C, H, W). conv_w: (1, 2, 7, 7). Returns (x * scale, scale); BN in eval mode."""
    N, C, H, W = x.shape
    HW = H * W
    HWp = ((HW + 127) // 128) * 128     # lane axis padded only at the BLOCK level (no HBM padding pass)

    # Fold eval-mode BatchNorm into the conv: bn(conv(z)) = conv(z) * a + b.
    a = bn_gamma.astype(jnp.float32) / jnp.sqrt(bn_var.astype(jnp.float32) + eps)   # (1,)
    b = bn_beta.astype(jnp.float32) - bn_mean.astype(jnp.float32) * a               # (1,)
    w_folded = (conv_w.astype(jnp.float32) * a[0]).reshape(-1)                      # (98,)
    params = jnp.concatenate([w_folded, b.reshape(1)])                              # (99,) -> SMEM

    # Precomputed border masks for the "same" 7x7 conv (resident in VMEM, DMA'd once).
    # Pad lanes [HW, HWp) are 0 so ragged-tail garbage never survives a masked tap.
    rows = jnp.repeat(jnp.arange(H, dtype=jnp.int32), W)                             # (HW,)
    cols = jnp.tile(jnp.arange(W, dtype=jnp.int32), H)                               # (HW,)
    h_masks = jnp.stack([((rows + dy - PAD) >= 0) & ((rows + dy - PAD) < H) for dy in range(KSIZE)])
    w_masks = jnp.stack([((cols + dx - PAD) >= 0) & ((cols + dx - PAD) < W) for dx in range(KSIZE)])
    masks = jnp.concatenate([h_masks, w_masks], axis=0).astype(jnp.float32)          # (14, HW)
    if HWp != HW:
        masks = jnp.pad(masks, ((0, 0), (0, HWp - HW)))   # tiny; x / y / scale stay UNPADDED in HBM

    # --- Per-generation block sizing: query VMEM capacity, budget the double-buffered
    #     input/output blocks plus f32 conv temporaries, keep >=2 (ideally >=4) grid steps. ---
    try:
        vmem_capacity = int(pltpu.get_tpu_info().vmem_capacity_bytes)
    except Exception:
        vmem_capacity = 64 * _MIB                                   # conservative (v7x per-TensorCore)
    vmem_budget = min(96 * _MIB, (3 * vmem_capacity) // 4)          # ~96 MiB on 128-MiB parts, 48 MiB on v7x

    itemsize = x.dtype.itemsize
    c_eff = ((C + 7) // 8) * 8                                      # sublane padding of the (C, HWp) tiles
    per_batch_vmem = (4 * c_eff * HWp * itemsize                    # 2x double-buffered x blocks + 2x y blocks
                      + 2 * 8 * HWp * 4                             # 2x double-buffered f32 scale blocks
                      + 16 * HWp * 4)                               # pooled maps + col accumulators + temps (f32)
    masks_bytes = 16 * HWp * 4
    nb = max(1, min(N, (vmem_budget - masks_bytes - 2 * _MIB) // per_batch_vmem))
    # Keep >=2 grid steps (megacore sharding on v7x / DMA-compute overlap), >=4 when blocks stay >=1 MiB.
    steps_target = 2 if N >= 2 else 1
    if N >= 4 and pl.cdiv(N, 4) * c_eff * HWp * itemsize >= _MIB:
        steps_target = 4
    nb = max(1, min(nb, pl.cdiv(N, steps_target)))
    grid_steps = pl.cdiv(N, nb)            # ragged last batch block is fine (batch rows are independent)
    # TODO(synk): for slabs where even one batch row cannot double-buffer in v7x's 64 MiB VMEM
    #             (e.g. C=1024 at 56x56), add a C-tiled two-pass (pool+conv+sigmoid, then gate).
    # TODO(synk): for tiny maps (H*W < 128), pack several batch elements' pixels onto the lane
    #             axis to avoid the up-to-2.6x lane-padding traffic.

    kernel = functools.partial(_spatial_gate_kernel, W=W)
    x_flat = x.reshape(N, C, HW)           # metadata-only reshape; no extra HBM pass

    y_flat, scale_flat = pl.pallas_call(
        kernel,
        out_shape=(
            jax.ShapeDtypeStruct((N, C, HW), x.dtype),
            jax.ShapeDtypeStruct((N, 1, HW), jnp.float32),
        ),
        grid_spec=pltpu.PrefetchScalarGridSpec(
            num_scalar_prefetch=0,
            grid=(grid_steps,),
            in_specs=[
                pl.BlockSpec(memory_space=pltpu.MemorySpace.SMEM),      # folded conv + BN params
                pl.BlockSpec((14, HWp), lambda n: (0, 0)),              # border masks (resident)
                pl.BlockSpec((nb, C, HWp), lambda n: (n, 0, 0)),        # x (ragged lane / batch tails OK)
            ],
            out_specs=[
                pl.BlockSpec((nb, C, HWp), lambda n: (n, 0, 0)),        # y = x * scale
                pl.BlockSpec((nb, 1, HWp), lambda n: (n, 0, 0)),        # scale (f32)
            ],
        ),
        compiler_params=pltpu.CompilerParams(
            dimension_semantics=("parallel",),
            vmem_limit_bytes=int(vmem_budget),
        ),
    )(params, masks, x_flat)

    y = y_flat.reshape(N, C, H, W)
    scale = scale_flat.reshape(N, 1, H, W)
    return y, scale


def reference(x, conv_w, bn_gamma, bn_beta, bn_mean, bn_var, eps=1e-5):
    """Pure-JAX reference matching the PyTorch SpatialGate forward (BN in eval mode)."""
    cmax = jnp.max(x, axis=1, keepdims=True)
    cmean = jnp.mean(x, axis=1, keepdims=True)
    xc = jnp.concatenate([cmax, cmean], axis=1)
    y = jax.lax.conv_general_dilated(
        xc, conv_w, window_strides=(1, 1), padding=((PAD, PAD), (PAD, PAD)),
        dimension_numbers=("NCHW", "OIHW", "NCHW"))
    a = bn_gamma / jnp.sqrt(bn_var + eps)
    b = bn_beta - bn_mean * a
    y = y * a.reshape(1, -1, 1, 1) + b.reshape(1, -1, 1, 1)
    scale = jax.nn.sigmoid(y)
    return x * scale, scale


if __name__ == "__main__":
    key = jax.random.PRNGKey(0)
    kx, kw, kx2 = jax.random.split(key, 3)

    # Conv2d(2, 1, 7, bias=False) weight + BatchNorm2d(1) eval-mode params / running stats.
    conv_w = jax.random.normal(kw, (1, 2, KSIZE, KSIZE), dtype=jnp.float32) * 0.1
    bn_gamma = jnp.full((1,), 1.3, jnp.float32)
    bn_beta = jnp.full((1,), -0.2, jnp.float32)
    bn_mean = jnp.full((1,), 0.1, jnp.float32)
    bn_var = jnp.full((1,), 0.5, jnp.float32)

    # f32 path, lane-aligned spatial (H*W = 256).
    x = jax.random.normal(kx, (2, 4, 16, 16), dtype=jnp.float32)
    y, scale = jax.block_until_ready(spatial_gate(x, conv_w, bn_gamma, bn_beta, bn_mean, bn_var))
    y_ref, s_ref = reference(x, conv_w, bn_gamma, bn_beta, bn_mean, bn_var)
    np.testing.assert_allclose(np.asarray(scale), np.asarray(s_ref), rtol=1e-4, atol=1e-5)
    np.testing.assert_allclose(np.asarray(y), np.asarray(y_ref), rtol=1e-4, atol=1e-5)

    # bf16 I/O path with ragged lane tail (14x14 = 196 -> 256-lane block) and ragged
    # batch tail (N=3 with nb=2) to exercise the unpadded-HBM / masked-tap design.
    xb = jax.random.normal(kx2, (3, 5, 14, 14), dtype=jnp.float32).astype(jnp.bfloat16)
    yb, sb = jax.block_until_ready(spatial_gate(xb, conv_w, bn_gamma, bn_beta, bn_mean, bn_var))
    y_ref_b, s_ref_b = reference(xb.astype(jnp.float32), conv_w, bn_gamma, bn_beta, bn_mean, bn_var)
    np.testing.assert_allclose(np.asarray(sb), np.asarray(s_ref_b), rtol=1e-3, atol=1e-3)
    np.testing.assert_allclose(np.asarray(yb.astype(jnp.float32)), np.asarray(y_ref_b),
                               rtol=5e-2, atol=5e-2)

    print("KERNEL_OK")
</pallas_src>

<mosaic_0001>
module attributes {stable_mosaic.version = 11 : i64} {
  func.func @_spatial_gate_kernel(%arg0: i32, %arg1: memref<99xf32, #tpu.memory_space<smem>>, %arg2: memref<14x256xf32, #tpu.memory_space<vmem>>, %arg3: memref<1x4x256xf32, #tpu.memory_space<vmem>>, %arg4: memref<1x4x256xf32, #tpu.memory_space<vmem>>, %arg5: memref<1x1x256xf32, #tpu.memory_space<vmem>>) attributes {dimension_semantics = [#tpu.dimension_semantics<parallel>], iteration_bounds = array<i64: 2>, scalar_prefetch = 0 : i64, scratch_operands = 0 : i64, tpu.core_type = #tpu.core_type<tc>, window_params = [{transform_indices = @transform_0, window_bounds = array<i64: 99>}, {pipeline_mode = #tpu.pipeline_mode<synchronous>, transform_indices = @transform_1, window_bounds = array<i64: 14, 256>}, {transform_indices = @transform_2, window_bounds = array<i64: 1, 4, 256>}, {transform_indices = @transform_3, window_bounds = array<i64: 1, 4, 256>}, {transform_indices = @transform_4, window_bounds = array<i64: 1, 1, 256>}]} {
    %c0 = arith.constant 0 : index
    %c0_0 = arith.constant 0 : index
    %c0_1 = arith.constant 0 : index
    %0 = vector.load %arg3[%c0, %c0_0, %c0_1] : memref<1x4x256xf32, #tpu.memory_space<vmem>>, vector<1x4x256xf32>
    %cst = arith.constant dense<0xFF800000> : vector<1x256xf32>
    %1 = vector.multi_reduction <maximumf>, %0, %cst [1] : vector<1x4x256xf32> to vector<1x256xf32>
    %c0_2 = arith.constant 0 : index
    %c0_3 = arith.constant 0 : index
    %c0_4 = arith.constant 0 : index
    %2 = vector.load %arg3[%c0_2, %c0_3, %c0_4] : memref<1x4x256xf32, #tpu.memory_space<vmem>>, vector<1x4x256xf32>
    %cst_5 = arith.constant dense<0.000000e+00> : vector<1x256xf32>
    %3 = vector.multi_reduction <add>, %2, %cst_5 [1] : vector<1x4x256xf32> to vector<1x256xf32>
    %cst_6 = arith.constant 2.500000e-01 : f32
    %4 = vector.broadcast %cst_6 : f32 to vector<1x256xf32>
    %5 = arith.mulf %3, %4 : vector<1x256xf32>
    %cst_7 = arith.constant 0.000000e+00 : f32
    %6 = vector.broadcast %cst_7 : f32 to vector<1x256xf32>
    %cst_8 = arith.constant 0.000000e+00 : f32
    %7 = vector.broadcast %cst_8 : f32 to vector<1x256xf32>
    %cst_9 = arith.constant 0.000000e+00 : f32
    %8 = vector.broadcast %cst_9 : f32 to vector<1x256xf32>
    %cst_10 = arith.constant 0.000000e+00 : f32
    %9 = vector.broadcast %cst_10 : f32 to vector<1x256xf32>
    %cst_11 = arith.constant 0.000000e+00 : f32
    %10 = vector.broadcast %cst_11 : f32 to vector<1x256xf32>
    %cst_12 = arith.constant 0.000000e+00 : f32
    %11 = vector.broadcast %cst_12 : f32 to vector<1x256xf32>
    %cst_13 = arith.constant 0.000000e+00 : f32
    %12 = vector.broadcast %cst_13 : f32 to vector<1x256xf32>
    %c48_i32 = arith.constant 48 : i32
    %13 = tpu.dynamic_rotate %1 by %c48_i32 dim 1 : vector<1x256xf32>, i32 -> vector<1x256xf32>
    %c48_i32_14 = arith.constant 48 : i32
    %14 = tpu.dynamic_rotate %5 by %c48_i32_14 dim 1 : vector<1x256xf32>, i32 -> vector<1x256xf32>
    %c0_15 = arith.constant 0 : index
    %c0_16 = arith.constant 0 : index
    %15 = vector.load %arg2[%c0_15, %c0_16] : memref<14x256xf32, #tpu.memory_space<vmem>>, vector<1x256xf32>
    %cst_17 = arith.constant 5.000000e-01 : f32
    %16 = vector.broadcast %cst_17 : f32 to vector<1x256xf32>
    %17 = arith.cmpf ogt, %15, %16 : vector<1x256xf32>
    %cst_18 = arith.constant 0.000000e+00 : f32
    %18 = vector.broadcast %cst_18 : f32 to vector<1x256xf32>
    %19 = arith.select %17, %13, %18 : vector<1x256xi1>, vector<1x256xf32>
    %cst_19 = arith.constant 0.000000e+00 : f32
    %20 = vector.broadcast %cst_19 : f32 to vector<1x256xf32>
    %21 = arith.select %17, %14, %20 : vector<1x256xi1>, vector<1x256xf32>
    %c0_20 = arith.constant 0 : index
    %22 = memref.load %arg1[%c0_20] : memref<99xf32, #tpu.memory_space<smem>>
    %23 = vector.broadcast %22 : f32 to vector<1x256xf32>
    %24 = arith.mulf %23, %19 : vector<1x256xf32>
    %25 = arith.addf %6, %24 : vector<1x256xf32>
    %c49 = arith.constant 49 : index
    %26 = memref.load %arg1[%c49] : memref<99xf32, #tpu.memory_space<smem>>
    %27 = vector.broadcast %26 : f32 to vector<1x256xf32>
    %28 = arith.mulf %27, %21 : vector<1x256xf32>
    %29 = arith.addf %25, %28 : vector<1x256xf32>
    %c1 = arith.constant 1 : index
    %30 = memref.load %arg1[%c1] : memref<99xf32, #tpu.memory_space<smem>>
    %31 = vector.broadcast %30 : f32 to vector<1x256xf32>
    %32 = arith.mulf %31, %19 : vector<1x256xf32>
    %33 = arith.addf %7, %32 : vector<1x256xf32>
    %c50 = arith.constant 50 : index
    %34 = memref.load %arg1[%c50] : memref<99xf32, #tpu.memory_space<smem>>
    %35 = vector.broadcast %34 : f32 to vector<1x256xf32>
    %36 = arith.mulf %35, %21 : vector<1x256xf32>
    %37 = arith.addf %33, %36 : vector<1x256xf32>
    %c2 = arith.constant 2 : index
    %38 = memref.load %arg1[%c2] : memref<99xf32, #tpu.memory_space<smem>>
    %39 = vector.broadcast %38 : f32 to vector<1x256xf32>
    %40 = arith.mulf %39, %19 : vector<1x256xf32>
    %41 = arith.addf %8, %40 : vector<1x256xf32>
    %c51 = arith.constant 51 : index
    %42 = memref.load %arg1[%c51] : memref<99xf32, #tpu.memory_space<smem>>
    %43 = vector.broadcast %42 : f32 to vector<1x256xf32>
    %44 = arith.mulf %43, %21 : vector<1x256xf32>
    %45 = arith.addf %41, %44 : vector<1x256xf32>
    %c3 = arith.constant 3 : index
    %46 = memref.load %arg1[%c3] : memref<99xf32, #tpu.memory_space<smem>>
    %47 = vector.broadcast %46 : f32 to vector<1x256xf32>
    %48 = arith.mulf %47, %19 : vector<1x256xf32>
    %49 = arith.addf %9, %48 : vector<1x256xf32>
    %c52 = arith.constant 52 : index
    %50 = memref.load %arg1[%c52] : memref<99xf32, #tpu.memory_space<smem>>
    %51 = vector.broadcast %50 : f32 to vector<1x256xf32>
    %52 = arith.mulf %51, %21 : vector<1x256xf32>
    %53 = arith.addf %49, %52 : vector<1x256xf32>
    %c4 = arith.constant 4 : index
    %54 = memref.load %arg1[%c4] : memref<99xf32, #tpu.memory_space<smem>>
    %55 = vector.broadcast %54 : f32 to vector<1x256xf32>
    %56 = arith.mulf %55, %19 : vector<1x256xf32>
    %57 = arith.addf %10, %56 : vector<1x256xf32>
    %c53 = arith.constant 53 : index
    %58 = memref.load %arg1[%c53] : memref<99xf32, #tpu.memory_space<smem>>
    %59 = vector.broadcast %58 : f32 to vector<1x256xf32>
    %60 = arith.mulf %59, %21 : vector<1x256xf32>
    %61 = arith.addf %57, %60 : vector<1x256xf32>
    %c5 = arith.constant 5 : index
    %62 = memref.load %arg1[%c5] : memref<99xf32, #tpu.memory_space<smem>>
    %63 = vector.broadcast %62 : f32 to vector<1x256xf32>
    %64 = arith.mulf %63, %19 : vector<1x256xf32>
    %65 = arith.addf %11, %64 : vector<1x256xf32>
    %c54 = arith.constant 54 : index
    %66 = memref.load %arg1[%c54] : memref<99xf32, #tpu.memory_space<smem>>
    %67 = vector.broadcast %66 : f32 to vector<1x256xf32>
    %68 = arith.mulf %67, %21 : vector<1x256xf32>
    %69 = arith.addf %65, %68 : vector<1x256xf32>
    %c6 = arith.constant 6 : index
    %70 = memref.load %arg1[%c6] : memref<99xf32, #tpu.memory_space<smem>>
    %71 = vector.broadcast %70 : f32 to vector<1x256xf32>
    %72 = arith.mulf %71, %19 : vector<1x256xf32>
    %73 = arith.addf %12, %72 : vector<1x256xf32>
    %c55 = arith.constant 55 : index
    %74 = memref.load %arg1[%c55] : memref<99xf32, #tpu.memory_space<smem>>
    %75 = vector.broadcast %74 : f32 to vector<1x256xf32>
    %76 = arith.mulf %75, %21 : vector<1x256xf32>
    %77 = arith.addf %73, %76 : vector<1x256xf32>
    %c32_i32 = arith.constant 32 : i32
    %78 = tpu.dynamic_rotate %1 by %c32_i32 dim 1 : vector<1x256xf32>, i32 -> vector<1x256xf32>
    %c32_i32_21 = arith.constant 32 : i32
    %79 = tpu.dynamic_rotate %5 by %c32_i32_21 dim 1 : vector<1x256xf32>, i32 -> vector<1x256xf32>
    %c1_22 = arith.constant 1 : index
    %c0_23 = arith.constant 0 : index
    %80 = vector.load %arg2[%c1_22, %c0_23] : memref<14x256xf32, #tpu.memory_space<vmem>>, vector<1x256xf32>
    %cst_24 = arith.constant 5.000000e-01 : f32
    %81 = vector.broadcast %cst_24 : f32 to vector<1x256xf32>
    %82 = arith.cmpf ogt, %80, %81 : vector<1x256xf32>
    %cst_25 = arith.constant 0.000000e+00 : f32
    %83 = vector.broadcast %cst_25 : f32 to vector<1x256xf32>
    %84 = arith.select %82, %78, %83 : vector<1x256xi1>, vector<1x256xf32>
    %cst_26 = arith.constant 0.000000e+00 : f32
    %85 = vector.broadcast %cst_26 : f32 to vector<1x256xf32>
    %86 = arith.select %82, %79, %85 : vector<1x256xi1>, vector<1x256xf32>
    %c7 = arith.constant 7 : index
    %87 = memref.load %arg1[%c7] : memref<99xf32, #tpu.memory_space<smem>>
    %88 = vector.broadcast %87 : f32 to vector<1x256xf32>
    %89 = arith.mulf %88, %84 : vector<1x256xf32>
    %90 = arith.addf %29, %89 : vector<1x256xf32>
    %c56 = arith.constant 56 : index
    %91 = memref.load %arg1[%c56] : memref<99xf32, #tpu.memory_space<smem>>
    %92 = vector.broadcast %91 : f32 to vector<1x256xf32>
    %93 = arith.mulf %92, %86 : vector<1x256xf32>
    %94 = arith.addf %90, %93 : vector<1x256xf32>
    %c8 = arith.constant 8 : index
    %95 = memref.load %arg1[%c8] : memref<99xf32, #tpu.memory_space<smem>>
    %96 = vector.broadcast %95 : f32 to vector<1x256xf32>
    %97 = arith.mulf %96, %84 : vector<1x256xf32>
    %98 = arith.addf %37, %97 : vector<1x256xf32>
    %c57 = arith.constant 57 : index
    %99 = memref.load %arg1[%c57] : memref<99xf32, #tpu.memory_space<smem>>
    %100 = vector.broadcast %99 : f32 to vector<1x256xf32>
    %101 = arith.mulf %100, %86 : vector<1x256xf32>
    %102 = arith.addf %98, %101 : vector<1x256xf32>
    %c9 = arith.constant 9 : index
    %103 = memref.load %arg1[%c9] : memref<99xf32, #tpu.memory_space<smem>>
    %104 = vector.broadcast %103 : f32 to vector<1x256xf32>
    %105 = arith.mulf %104, %84 : vector<1x256xf32>
    %106 = arith.addf %45, %105 : vector<1x256xf32>
    %c58 = arith.constant 58 : index
    %107 = memref.load %arg1[%c58] : memref<99xf32, #tpu.memory_space<smem>>
    %108 = vector.broadcast %107 : f32 to vector<1x256xf32>
    %109 = arith.mulf %108, %86 : vector<1x256xf32>
    %110 = arith.addf %106, %109 : vector<1x256xf32>
    %c10 = arith.constant 10 : index
    %111 = memref.load %arg1[%c10] : memref<99xf32, #tpu.memory_space<smem>>
    %112 = vector.broadcast %111 : f32 to vector<1x256xf32>
    %113 = arith.mulf %112, %84 : vector<1x256xf32>
    %114 = arith.addf %53, %113 : vector<1x256xf32>
    %c59 = arith.constant 59 : index
    %115 = memref.load %arg1[%c59] : memref<99xf32, #tpu.memory_space<smem>>
    %116 = vector.broadcast %115 : f32 to vector<1x256xf32>
    %117 = arith.mulf %116, %86 : vector<1x256xf32>
    %118 = arith.addf %114, %117 : vector<1x256xf32>
    %c11 = arith.constant 11 : index
    %119 = memref.load %arg1[%c11] : memref<99xf32, #tpu.memory_space<smem>>
    %120 = vector.broadcast %119 : f32 to vector<1x256xf32>
    %121 = arith.mulf %120, %84 : vector<1x256xf32>
    %122 = arith.addf %61, %121 : vector<1x256xf32>
    %c60 = arith.constant 60 : index
    %123 = memref.load %arg1[%c60] : memref<99xf32, #tpu.memory_space<smem>>
    %124 = vector.broadcast %123 : f32 to vector<1x256xf32>
    %125 = arith.mulf %124, %86 : vector<1x256xf32>
    %126 = arith.addf %122, %125 : vector<1x256xf32>
    %c12 = arith.constant 12 : index
    %127 = memref.load %arg1[%c12] : memref<99xf32, #tpu.memory_space<smem>>
    %128 = vector.broadcast %127 : f32 to vector<1x256xf32>
    %129 = arith.mulf %128, %84 : vector<1x256xf32>
    %130 = arith.addf %69, %129 : vector<1x256xf32>
    %c61 = arith.constant 61 : index
    %131 = memref.load %arg1[%c61] : memref<99xf32, #tpu.memory_space<smem>>
    %132 = vector.broadcast %131 : f32 to vector<1x256xf32>
    %133 = arith.mulf %132, %86 : vector<1x256xf32>
    %134 = arith.addf %130, %133 : vector<1x256xf32>
    %c13 = arith.constant 13 : index
    %135 = memref.load %arg1[%c13] : memref<99xf32, #tpu.memory_space<smem>>
    %136 = vector.broadcast %135 : f32 to vector<1x256xf32>
    %137 = arith.mulf %136, %84 : vector<1x256xf32>
    %138 = arith.addf %77, %137 : vector<1x256xf32>
    %c62 = arith.constant 62 : index
    %139 = memref.load %arg1[%c62] : memref<99xf32, #tpu.memory_space<smem>>
    %140 = vector.broadcast %139 : f32 to vector<1x256xf32>
    %141 = arith.mulf %140, %86 : vector<1x256xf32>
    %142 = arith.addf %138, %141 : vector<1x256xf32>
    %c16_i32 = arith.constant 16 : i32
    %143 = tpu.dynamic_rotate %1 by %c16_i32 dim 1 : vector<1x256xf32>, i32 -> vector<1x256xf32>
    %c16_i32_27 = arith.constant 16 : i32
    %144 = tpu.dynamic_rotate %5 by %c16_i32_27 dim 1 : vector<1x256xf32>, i32 -> vector<1x256xf32>
    %c2_28 = arith.constant 2 : index
    %c0_29 = arith.constant 0 : index
    %145 = vector.load %arg2[%c2_28, %c0_29] : memref<14x256xf32, #tpu.memory_space<vmem>>, vector<1x256xf32>
    %cst_30 = arith.constant 5.000000e-01 : f32
    %146 = vector.broadcast %cst_30 : f32 to vector<1x256xf32>
    %147 = arith.cmpf ogt, %145, %146 : vector<1x256xf32>
    %cst_31 = arith.constant 0.000000e+00 : f32
    %148 = vector.broadcast %cst_31 : f32 to vector<1x256xf32>
    %149 = arith.select %147, %143, %148 : vector<1x256xi1>, vector<1x256xf32>
    %cst_32 = arith.constant 0.000000e+00 : f32
    %150 = vector.broadcast %cst_32 : f32 to vector<1x256xf32>
    %151 = arith.select %147, %144, %150 : vector<1x256xi1>, vector<1x256xf32>
    %c14 = arith.constant 14 : index
    %152 = memref.load %arg1[%c14] : memref<99xf32, #tpu.memory_space<smem>>
    %153 = vector.broadcast %152 : f32 to vector<1x256xf32>
    %154 = arith.mulf %153, %149 : vector<1x256xf32>
    %155 = arith.addf %94, %154 : vector<1x256xf32>
    %c63 = arith.constant 63 : index
    %156 = memref.load %arg1[%c63] : memref<99xf32, #tpu.memory_space<smem>>
    %157 = vector.broadcast %156 : f32 to vector<1x256xf32>
    %158 = arith.mulf %157, %151 : vector<1x256xf32>
    %159 = arith.addf %155, %158 : vector<1x256xf32>
    %c15 = arith.constant 15 : index
    %160 = memref.load %arg1[%c15] : memref<99xf32, #tpu.memory_space<smem>>
    %161 = vector.broadcast %160 : f32 to vector<1x256xf32>
    %162 = arith.mulf %161, %149 : vector<1x256xf32>
    %163 = arith.addf %102, %162 : vector<1x256xf32>
    %c64 = arith.constant 64 : index
    %164 = memref.load %arg1[%c64] : memref<99xf32, #tpu.memory_space<smem>>
    %165 = vector.broadcast %164 : f32 to vector<1x256xf32>
    %166 = arith.mulf %165, %151 : vector<1x256xf32>
    %167 = arith.addf %163, %166 : vector<1x256xf32>
    %c16 = arith.constant 16 : index
    %168 = memref.load %arg1[%c16] : memref<99xf32, #tpu.memory_space<smem>>
    %169 = vector.broadcast %168 : f32 to vector<1x256xf32>
    %170 = arith.mulf %169, %149 : vector<1x256xf32>
    %171 = arith.addf %110, %170 : vector<1x256xf32>
    %c65 = arith.constant 65 : index
    %172 = memref.load %arg1[%c65] : memref<99xf32, #tpu.memory_space<smem>>
    %173 = vector.broadcast %172 : f32 to vector<1x256xf32>
    %174 = arith.mulf %173, %151 : vector<1x256xf32>
    %175 = arith.addf %171, %174 : vector<1x256xf32>
    %c17 = arith.constant 17 : index
    %176 = memref.load %arg1[%c17] : memref<99xf32, #tpu.memory_space<smem>>
    %177 = vector.broadcast %176 : f32 to vector<1x256xf32>
    %178 = arith.mulf %177, %149 : vector<1x256xf32>
    %179 = arith.addf %118, %178 : vector<1x256xf32>
    %c66 = arith.constant 66 : index
    %180 = memref.load %arg1[%c66] : memref<99xf32, #tpu.memory_space<smem>>
    %181 = vector.broadcast %180 : f32 to vector<1x256xf32>
    %182 = arith.mulf %181, %151 : vector<1x256xf32>
    %183 = arith.addf %179, %182 : vector<1x256xf32>
    %c18 = arith.constant 18 : index
    %184 = memref.load %arg1[%c18] : memref<99xf32, #tpu.memory_space<smem>>
    %185 = vector.broadcast %184 : f32 to vector<1x256xf32>
    %186 = arith.mulf %185, %149 : vector<1x256xf32>
    %187 = arith.addf %126, %186 : vector<1x256xf32>
    %c67 = arith.constant 67 : index
    %188 = memref.load %arg1[%c67] : memref<99xf32, #tpu.memory_space<smem>>
    %189 = vector.broadcast %188 : f32 to vector<1x256xf32>
    %190 = arith.mulf %189, %151 : vector<1x256xf32>
    %191 = arith.addf %187, %190 : vector<1x256xf32>
    %c19 = arith.constant 19 : index
    %192 = memref.load %arg1[%c19] : memref<99xf32, #tpu.memory_space<smem>>
    %193 = vector.broadcast %192 : f32 to vector<1x256xf32>
    %194 = arith.mulf %193, %149 : vector<1x256xf32>
    %195 = arith.addf %134, %194 : vector<1x256xf32>
    %c68 = arith.constant 68 : index
    %196 = memref.load %arg1[%c68] : memref<99xf32, #tpu.memory_space<smem>>
    %197 = vector.broadcast %196 : f32 to vector<1x256xf32>
    %198 = arith.mulf %197, %151 : vector<1x256xf32>
    %199 = arith.addf %195, %198 : vector<1x256xf32>
    %c20 = arith.constant 20 : index
    %200 = memref.load %arg1[%c20] : memref<99xf32, #tpu.memory_space<smem>>
    %201 = vector.broadcast %200 : f32 to vector<1x256xf32>
    %202 = arith.mulf %201, %149 : vector<1x256xf32>
    %203 = arith.addf %142, %202 : vector<1x256xf32>
    %c69 = arith.constant 69 : index
    %204 = memref.load %arg1[%c69] : memref<99xf32, #tpu.memory_space<smem>>
    %205 = vector.broadcast %204 : f32 to vector<1x256xf32>
    %206 = arith.mulf %205, %151 : vector<1x256xf32>
    %207 = arith.addf %203, %206 : vector<1x256xf32>
    %c3_33 = arith.constant 3 : index
    %c0_34 = arith.constant 0 : index
    %208 = vector.load %arg2[%c3_33, %c0_34] : memref<14x256xf32, #tpu.memory_space<vmem>>, vector<1x256xf32>
    %cst_35 = arith.constant 5.000000e-01 : f32
    %209 = vector.broadcast %cst_35 : f32 to vector<1x256xf32>
    %210 = arith.cmpf ogt, %208, %209 : vector<1x256xf32>
    %cst_36 = arith.constant 0.000000e+00 : f32
    %211 = vector.broadcast %cst_36 : f32 to vector<1x256xf32>
    %212 = arith.select %210, %1, %211 : vector<1x256xi1>, vector<1x256xf32>
    %cst_37 = arith.constant 0.000000e+00 : f32
    %213 = vector.broadcast %cst_37 : f32 to vector<1x256xf32>
    %214 = arith.select %210, %5, %213 : vector<1x256xi1>, vector<1x256xf32>
    %c21 = arith.constant 21 : index
    %215 = memref.load %arg1[%c21] : memref<99xf32, #tpu.memory_space<smem>>
    %216 = vector.broadcast %215 : f32 to vector<1x256xf32>
    %217 = arith.mulf %216, %212 : vector<1x256xf32>
    %218 = arith.addf %159, %217 : vector<1x256xf32>
    %c70 = arith.constant 70 : index
    %219 = memref.load %arg1[%c70] : memref<99xf32, #tpu.memory_space<smem>>
    %220 = vector.broadcast %219 : f32 to vector<1x256xf32>
    %221 = arith.mulf %220, %214 : vector<1x256xf32>
    %222 = arith.addf %218, %221 : vector<1x256xf32>
    %c22 = arith.constant 22 : index
    %223 = memref.load %arg1[%c22] : memref<99xf32, #tpu.memory_space<smem>>
    %224 = vector.broadcast %223 : f32 to vector<1x256xf32>
    %225 = arith.mulf %224, %212 : vector<1x256xf32>
    %226 = arith.addf %167, %225 : vector<1x256xf32>
    %c71 = arith.constant 71 : index
    %227 = memref.load %arg1[%c71] : memref<99xf32, #tpu.memory_space<smem>>
    %228 = vector.broadcast %227 : f32 to vector<1x256xf32>
    %229 = arith.mulf %228, %214 : vector<1x256xf32>
    %230 = arith.addf %226, %229 : vector<1x256xf32>
    %c23 = arith.constant 23 : index
    %231 = memref.load %arg1[%c23] : memref<99xf32, #tpu.memory_space<smem>>
    %232 = vector.broadcast %231 : f32 to vector<1x256xf32>
    %233 = arith.mulf %232, %212 : vector<1x256xf32>
    %234 = arith.addf %175, %233 : vector<1x256xf32>
    %c72 = arith.constant 72 : index
    %235 = memref.load %arg1[%c72] : memref<99xf32, #tpu.memory_space<smem>>
    %236 = vector.broadcast %235 : f32 to vector<1x256xf32>
    %237 = arith.mulf %236, %214 : vector<1x256xf32>
    %238 = arith.addf %234, %237 : vector<1x256xf32>
    %c24 = arith.constant 24 : index
    %239 = memref.load %arg1[%c24] : memref<99xf32, #tpu.memory_space<smem>>
    %240 = vector.broadcast %239 : f32 to vector<1x256xf32>
    %241 = arith.mulf %240, %212 : vector<1x256xf32>
    %242 = arith.addf %183, %241 : vector<1x256xf32>
    %c73 = arith.constant 73 : index
    %243 = memref.load %arg1[%c73] : memref<99xf32, #tpu.memory_space<smem>>
    %244 = vector.broadcast %243 : f32 to vector<1x256xf32>
    %245 = arith.mulf %244, %214 : vector<1x256xf32>
    %246 = arith.addf %242, %245 : vector<1x256xf32>
    %c25 = arith.constant 25 : index
    %247 = memref.load %arg1[%c25] : memref<99xf32, #tpu.memory_space<smem>>
    %248 = vector.broadcast %247 : f32 to vector<1x256xf32>
    %249 = arith.mulf %248, %212 : vector<1x256xf32>
    %250 = arith.addf %191, %249 : vector<1x256xf32>
    %c74 = arith.constant 74 : index
    %251 = memref.load %arg1[%c74] : memref<99xf32, #tpu.memory_space<smem>>
    %252 = vector.broadcast %251 : f32 to vector<1x256xf32>
    %253 = arith.mulf %252, %214 : vector<1x256xf32>
    %254 = arith.addf %250, %253 : vector<1x256xf32>
    %c26 = arith.constant 26 : index
    %255 = memref.load %arg1[%c26] : memref<99xf32, #tpu.memory_space<smem>>
    %256 = vector.broadcast %255 : f32 to vector<1x256xf32>
    %257 = arith.mulf %256, %212 : vector<1x256xf32>
    %258 = arith.addf %199, %257 : vector<1x256xf32>
    %c75 = arith.constant 75 : index
    %259 = memref.load %arg1[%c75] : memref<99xf32, #tpu.memory_space<smem>>
    %260 = vector.broadcast %259 : f32 to vector<1x256xf32>
    %261 = arith.mulf %260, %214 : vector<1x256xf32>
    %262 = arith.addf %258, %261 : vector<1x256xf32>
    %c27 = arith.constant 27 : index
    %263 = memref.load %arg1[%c27] : memref<99xf32, #tpu.memory_space<smem>>
    %264 = vector.broadcast %263 : f32 to vector<1x256xf32>
    %265 = arith.mulf %264, %212 : vector<1x256xf32>
    %266 = arith.addf %207, %265 : vector<1x256xf32>
    %c76 = arith.constant 76 : index
    %267 = memref.load %arg1[%c76] : memref<99xf32, #tpu.memory_space<smem>>
    %268 = vector.broadcast %267 : f32 to vector<1x256xf32>
    %269 = arith.mulf %268, %214 : vector<1x256xf32>
    %270 = arith.addf %266, %269 : vector<1x256xf32>
    %c240_i32 = arith.constant 240 : i32
    %271 = tpu.dynamic_rotate %1 by %c240_i32 dim 1 : vector<1x256xf32>, i32 -> vector<1x256xf32>
    %c240_i32_38 = arith.constant 240 : i32
    %272 = tpu.dynamic_rotate %5 by %c240_i32_38 dim 1 : vector<1x256xf32>, i32 -> vector<1x256xf32>
    %c4_39 = arith.constant 4 : index
    %c0_40 = arith.constant 0 : index
    %273 = vector.load %arg2[%c4_39, %c0_40] : memref<14x256xf32, #tpu.memory_space<vmem>>, vector<1x256xf32>
    %cst_41 = arith.constant 5.000000e-01 : f32
    %274 = vector.broadcast %cst_41 : f32 to vector<1x256xf32>
    %275 = arith.cmpf ogt, %273, %274 : vector<1x256xf32>
    %cst_42 = arith.constant 0.000000e+00 : f32
    %276 = vector.broadcast %cst_42 : f32 to vector<1x256xf32>
    %277 = arith.select %275, %271, %276 : vector<1x256xi1>, vector<1x256xf32>
    %cst_43 = arith.constant 0.000000e+00 : f32
    %278 = vector.broadcast %cst_43 : f32 to vector<1x256xf32>
    %279 = arith.select %275, %272, %278 : vector<1x256xi1>, vector<1x256xf32>
    %c28 = arith.constant 28 : index
    %280 = memref.load %arg1[%c28] : memref<99xf32, #tpu.memory_space<smem>>
    %281 = vector.broadcast %280 : f32 to vector<1x256xf32>
    %282 = arith.mulf %281, %277 : vector<1x256xf32>
    %283 = arith.addf %222, %282 : vector<1x256xf32>
    %c77 = arith.constant 77 : index
    %284 = memref.load %arg1[%c77] : memref<99xf32, #tpu.memory_space<smem>>
    %285 = vector.broadcast %284 : f32 to vector<1x256xf32>
    %286 = arith.mulf %285, %279 : vector<1x256xf32>
    %287 = arith.addf %283, %286 : vector<1x256xf32>
    %c29 = arith.constant 29 : index
    %288 = memref.load %arg1[%c29] : memref<99xf32, #tpu.memory_space<smem>>
    %289 = vector.broadcast %288 : f32 to vector<1x256xf32>
    %290 = arith.mulf %289, %277 : vector<1x256xf32>
    %291 = arith.addf %230, %290 : vector<1x256xf32>
    %c78 = arith.constant 78 : index
    %292 = memref.load %arg1[%c78] : memref<99xf32, #tpu.memory_space<smem>>
    %293 = vector.broadcast %292 : f32 to vector<1x256xf32>
    %294 = arith.mulf %293, %279 : vector<1x256xf32>
    %295 = arith.addf %291, %294 : vector<1x256xf32>
    %c30 = arith.constant 30 : index
    %296 = memref.load %arg1[%c30] : memref<99xf32, #tpu.memory_space<smem>>
    %297 = vector.broadcast %296 : f32 to vector<1x256xf32>
    %298 = arith.mulf %297, %277 : vector<1x256xf32>
    %299 = arith.addf %238, %298 : vector<1x256xf32>
    %c79 = arith.constant 79 : index
    %300 = memref.load %arg1[%c79] : memref<99xf32, #tpu.memory_space<smem>>
    %301 = vector.broadcast %300 : f32 to vector<1x256xf32>
    %302 = arith.mulf %301, %279 : vector<1x256xf32>
    %303 = arith.addf %299, %302 : vector<1x256xf32>
    %c31 = arith.constant 31 : index
    %304 = memref.load %arg1[%c31] : memref<99xf32, #tpu.memory_space<smem>>
    %305 = vector.broadcast %304 : f32 to vector<1x256xf32>
    %306 = arith.mulf %305, %277 : vector<1x256xf32>
    %307 = arith.addf %246, %306 : vector<1x256xf32>
    %c80 = arith.constant 80 : index
    %308 = memref.load %arg1[%c80] : memref<99xf32, #tpu.memory_space<smem>>
    %309 = vector.broadcast %308 : f32 to vector<1x256xf32>
    %310 = arith.mulf %309, %279 : vector<1x256xf32>
    %311 = arith.addf %307, %310 : vector<1x256xf32>
    %c32 = arith.constant 32 : index
    %312 = memref.load %arg1[%c32] : memref<99xf32, #tpu.memory_space<smem>>
    %313 = vector.broadcast %312 : f32 to vector<1x256xf32>
    %314 = arith.mulf %313, %277 : vector<1x256xf32>
    %315 = arith.addf %254, %314 : vector<1x256xf32>
    %c81 = arith.constant 81 : index
    %316 = memref.load %arg1[%c81] : memref<99xf32, #tpu.memory_space<smem>>
    %317 = vector.broadcast %316 : f32 to vector<1x256xf32>
    %318 = arith.mulf %317, %279 : vector<1x256xf32>
    %319 = arith.addf %315, %318 : vector<1x256xf32>
    %c33 = arith.constant 33 : index
    %320 = memref.load %arg1[%c33] : memref<99xf32, #tpu.memory_space<smem>>
    %321 = vector.broadcast %320 : f32 to vector<1x256xf32>
    %322 = arith.mulf %321, %277 : vector<1x256xf32>
    %323 = arith.addf %262, %322 : vector<1x256xf32>
    %c82 = arith.constant 82 : index
    %324 = memref.load %arg1[%c82] : memref<99xf32, #tpu.memory_space<smem>>
    %325 = vector.broadcast %324 : f32 to vector<1x256xf32>
    %326 = arith.mulf %325, %279 : vector<1x256xf32>
    %327 = arith.addf %323, %326 : vector<1x256xf32>
    %c34 = arith.constant 34 : index
    %328 = memref.load %arg1[%c34] : memref<99xf32, #tpu.memory_space<smem>>
    %329 = vector.broadcast %328 : f32 to vector<1x256xf32>
    %330 = arith.mulf %329, %277 : vector<1x256xf32>
    %331 = arith.addf %270, %330 : vector<1x256xf32>
    %c83 = arith.constant 83 : index
    %332 = memref.load %arg1[%c83] : memref<99xf32, #tpu.memory_space<smem>>
    %333 = vector.broadcast %332 : f32 to vector<1x256xf32>
    %334 = arith.mulf %333, %279 : vector<1x256xf32>
    %335 = arith.addf %331, %334 : vector<1x256xf32>
    %c224_i32 = arith.constant 224 : i32
    %336 = tpu.dynamic_rotate %1 by %c224_i32 dim 1 : vector<1x256xf32>, i32 -> vector<1x256xf32>
    %c224_i32_44 = arith.constant 224 : i32
    %337 = tpu.dynamic_rotate %5 by %c224_i32_44 dim 1 : vector<1x256xf32>, i32 -> vector<1x256xf32>
    %c5_45 = arith.constant 5 : index
    %c0_46 = arith.constant 0 : index
    %338 = vector.load %arg2[%c5_45, %c0_46] : memref<14x256xf32, #tpu.memory_space<vmem>>, vector<1x256xf32>
    %cst_47 = arith.constant 5.000000e-01 : f32
    %339 = vector.broadcast %cst_47 : f32 to vector<1x256xf32>
    %340 = arith.cmpf ogt, %338, %339 : vector<1x256xf32>
    %cst_48 = arith.constant 0.000000e+00 : f32
    %341 = vector.broadcast %cst_48 : f32 to vector<1x256xf32>
    %342 = arith.select %340, %336, %341 : vector<1x256xi1>, vector<1x256xf32>
    %cst_49 = arith.constant 0.000000e+00 : f32
    %343 = vector.broadcast %cst_49 : f32 to vector<1x256xf32>
    %344 = arith.select %340, %337, %343 : vector<1x256xi1>, vector<1x256xf32>
    %c35 = arith.constant 35 : index
    %345 = memref.load %arg1[%c35] : memref<99xf32, #tpu.memory_space<smem>>
    %346 = vector.broadcast %345 : f32 to vector<1x256xf32>
    %347 = arith.mulf %346, %342 : vector<1x256xf32>
    %348 = arith.addf %287, %347 : vector<1x256xf32>
    %c84 = arith.constant 84 : index
    %349 = memref.load %arg1[%c84] : memref<99xf32, #tpu.memory_space<smem>>
    %350 = vector.broadcast %349 : f32 to vector<1x256xf32>
    %351 = arith.mulf %350, %344 : vector<1x256xf32>
    %352 = arith.addf %348, %351 : vector<1x256xf32>
    %c36 = arith.constant 36 : index
    %353 = memref.load %arg1[%c36] : memref<99xf32, #tpu.memory_space<smem>>
    %354 = vector.broadcast %353 : f32 to vector<1x256xf32>
    %355 = arith.mulf %354, %342 : vector<1x256xf32>
    %356 = arith.addf %295, %355 : vector<1x256xf32>
    %c85 = arith.constant 85 : index
    %357 = memref.load %arg1[%c85] : memref<99xf32, #tpu.memory_space<smem>>
    %358 = vector.broadcast %357 : f32 to vector<1x256xf32>
    %359 = arith.mulf %358, %344 : vector<1x256xf32>
    %360 = arith.addf %356, %359 : vector<1x256xf32>
    %c37 = arith.constant 37 : index
    %361 = memref.load %arg1[%c37] : memref<99xf32, #tpu.memory_space<smem>>
    %362 = vector.broadcast %361 : f32 to vector<1x256xf32>
    %363 = arith.mulf %362, %342 : vector<1x256xf32>
    %364 = arith.addf %303, %363 : vector<1x256xf32>
    %c86 = arith.constant 86 : index
    %365 = memref.load %arg1[%c86] : memref<99xf32, #tpu.memory_space<smem>>
    %366 = vector.broadcast %365 : f32 to vector<1x256xf32>
    %367 = arith.mulf %366, %344 : vector<1x256xf32>
    %368 = arith.addf %364, %367 : vector<1x256xf32>
    %c38 = arith.constant 38 : index
    %369 = memref.load %arg1[%c38] : memref<99xf32, #tpu.memory_space<smem>>
    %370 = vector.broadcast %369 : f32 to vector<1x256xf32>
    %371 = arith.mulf %370, %342 : vector<1x256xf32>
    %372 = arith.addf %311, %371 : vector<1x256xf32>
    %c87 = arith.constant 87 : index
    %373 = memref.load %arg1[%c87] : memref<99xf32, #tpu.memory_space<smem>>
    %374 = vector.broadcast %373 : f32 to vector<1x256xf32>
    %375 = arith.mulf %374, %344 : vector<1x256xf32>
    %376 = arith.addf %372, %375 : vector<1x256xf32>
    %c39 = arith.constant 39 : index
    %377 = memref.load %arg1[%c39] : memref<99xf32, #tpu.memory_space<smem>>
    %378 = vector.broadcast %377 : f32 to vector<1x256xf32>
    %379 = arith.mulf %378, %342 : vector<1x256xf32>
    %380 = arith.addf %319, %379 : vector<1x256xf32>
    %c88 = arith.constant 88 : index
    %381 = memref.load %arg1[%c88] : memref<99xf32, #tpu.memory_space<smem>>
    %382 = vector.broadcast %381 : f32 to vector<1x256xf32>
    %383 = arith.mulf %382, %344 : vector<1x256xf32>
    %384 = arith.addf %380, %383 : vector<1x256xf32>
    %c40 = arith.constant 40 : index
    %385 = memref.load %arg1[%c40] : memref<99xf32, #tpu.memory_space<smem>>
    %386 = vector.broadcast %385 : f32 to vector<1x256xf32>
    %387 = arith.mulf %386, %342 : vector<1x256xf32>
    %388 = arith.addf %327, %387 : vector<1x256xf32>
    %c89 = arith.constant 89 : index
    %389 = memref.load %arg1[%c89] : memref<99xf32, #tpu.memory_space<smem>>
    %390 = vector.broadcast %389 : f32 to vector<1x256xf32>
    %391 = arith.mulf %390, %344 : vector<1x256xf32>
    %392 = arith.addf %388, %391 : vector<1x256xf32>
    %c41 = arith.constant 41 : index
    %393 = memref.load %arg1[%c41] : memref<99xf32, #tpu.memory_space<smem>>
    %394 = vector.broadcast %393 : f32 to vector<1x256xf32>
    %395 = arith.mulf %394, %342 : vector<1x256xf32>
    %396 = arith.addf %335, %395 : vector<1x256xf32>
    %c90 = arith.constant 90 : index
    %397 = memref.load %arg1[%c90] : memref<99xf32, #tpu.memory_space<smem>>
    %398 = vector.broadcast %397 : f32 to vector<1x256xf32>
    %399 = arith.mulf %398, %344 : vector<1x256xf32>
    %400 = arith.addf %396, %399 : vector<1x256xf32>
    %c208_i32 = arith.constant 208 : i32
    %401 = tpu.dynamic_rotate %1 by %c208_i32 dim 1 : vector<1x256xf32>, i32 -> vector<1x256xf32>
    %c208_i32_50 = arith.constant 208 : i32
    %402 = tpu.dynamic_rotate %5 by %c208_i32_50 dim 1 : vector<1x256xf32>, i32 -> vector<1x256xf32>
    %c6_51 = arith.constant 6 : index
    %c0_52 = arith.constant 0 : index
    %403 = vector.load %arg2[%c6_51, %c0_52] : memref<14x256xf32, #tpu.memory_space<vmem>>, vector<1x256xf32>
    %cst_53 = arith.constant 5.000000e-01 : f32
    %404 = vector.broadcast %cst_53 : f32 to vector<1x256xf32>
    %405 = arith.cmpf ogt, %403, %404 : vector<1x256xf32>
    %cst_54 = arith.constant 0.000000e+00 : f32
    %406 = vector.broadcast %cst_54 : f32 to vector<1x256xf32>
    %407 = arith.select %405, %401, %406 : vector<1x256xi1>, vector<1x256xf32>
    %cst_55 = arith.constant 0.000000e+00 : f32
    %408 = vector.broadcast %cst_55 : f32 to vector<1x256xf32>
    %409 = arith.select %405, %402, %408 : vector<1x256xi1>, vector<1x256xf32>
    %c42 = arith.constant 42 : index
    %410 = memref.load %arg1[%c42] : memref<99xf32, #tpu.memory_space<smem>>
    %411 = vector.broadcast %410 : f32 to vector<1x256xf32>
    %412 = arith.mulf %411, %407 : vector<1x256xf32>
    %413 = arith.addf %352, %412 : vector<1x256xf32>
    %c91 = arith.constant 91 : index
    %414 = memref.load %arg1[%c91] : memref<99xf32, #tpu.memory_space<smem>>
    %415 = vector.broadcast %414 : f32 to vector<1x256xf32>
    %416 = arith.mulf %415, %409 : vector<1x256xf32>
    %417 = arith.addf %413, %416 : vector<1x256xf32>
    %c43 = arith.constant 43 : index
    %418 = memref.load %arg1[%c43] : memref<99xf32, #tpu.memory_space<smem>>
    %419 = vector.broadcast %418 : f32 to vector<1x256xf32>
    %420 = arith.mulf %419, %407 : vector<1x256xf32>
    %421 = arith.addf %360, %420 : vector<1x256xf32>
    %c92 = arith.constant 92 : index
    %422 = memref.load %arg1[%c92] : memref<99xf32, #tpu.memory_space<smem>>
    %423 = vector.broadcast %422 : f32 to vector<1x256xf32>
    %424 = arith.mulf %423, %409 : vector<1x256xf32>
    %425 = arith.addf %421, %424 : vector<1x256xf32>
    %c44 = arith.constant 44 : index
    %426 = memref.load %arg1[%c44] : memref<99xf32, #tpu.memory_space<smem>>
    %427 = vector.broadcast %426 : f32 to vector<1x256xf32>
    %428 = arith.mulf %427, %407 : vector<1x256xf32>
    %429 = arith.addf %368, %428 : vector<1x256xf32>
    %c93 = arith.constant 93 : index
    %430 = memref.load %arg1[%c93] : memref<99xf32, #tpu.memory_space<smem>>
    %431 = vector.broadcast %430 : f32 to vector<1x256xf32>
    %432 = arith.mulf %431, %409 : vector<1x256xf32>
    %433 = arith.addf %429, %432 : vector<1x256xf32>
    %c45 = arith.constant 45 : index
    %434 = memref.load %arg1[%c45] : memref<99xf32, #tpu.memory_space<smem>>
    %435 = vector.broadcast %434 : f32 to vector<1x256xf32>
    %436 = arith.mulf %435, %407 : vector<1x256xf32>
    %437 = arith.addf %376, %436 : vector<1x256xf32>
    %c94 = arith.constant 94 : index
    %438 = memref.load %arg1[%c94] : memref<99xf32, #tpu.memory_space<smem>>
    %439 = vector.broadcast %438 : f32 to vector<1x256xf32>
    %440 = arith.mulf %439, %409 : vector<1x256xf32>
    %441 = arith.addf %437, %440 : vector<1x256xf32>
    %c46 = arith.constant 46 : index
    %442 = memref.load %arg1[%c46] : memref<99xf32, #tpu.memory_space<smem>>
    %443 = vector.broadcast %442 : f32 to vector<1x256xf32>
    %444 = arith.mulf %443, %407 : vector<1x256xf32>
    %445 = arith.addf %384, %444 : vector<1x256xf32>
    %c95 = arith.constant 95 : index
    %446 = memref.load %arg1[%c95] : memref<99xf32, #tpu.memory_space<smem>>
    %447 = vector.broadcast %446 : f32 to vector<1x256xf32>
    %448 = arith.mulf %447, %409 : vector<1x256xf32>
    %449 = arith.addf %445, %448 : vector<1x256xf32>
    %c47 = arith.constant 47 : index
    %450 = memref.load %arg1[%c47] : memref<99xf32, #tpu.memory_space<smem>>
    %451 = vector.broadcast %450 : f32 to vector<1x256xf32>
    %452 = arith.mulf %451, %407 : vector<1x256xf32>
    %453 = arith.addf %392, %452 : vector<1x256xf32>
    %c96 = arith.constant 96 : index
    %454 = memref.load %arg1[%c96] : memref<99xf32, #tpu.memory_space<smem>>
    %455 = vector.broadcast %454 : f32 to vector<1x256xf32>
    %456 = arith.mulf %455, %409 : vector<1x256xf32>
    %457 = arith.addf %453, %456 : vector<1x256xf32>
    %c48 = arith.constant 48 : index
    %458 = memref.load %arg1[%c48] : memref<99xf32, #tpu.memory_space<smem>>
    %459 = vector.broadcast %458 : f32 to vector<1x256xf32>
    %460 = arith.mulf %459, %407 : vector<1x256xf32>
    %461 = arith.addf %400, %460 : vector<1x256xf32>
    %c97 = arith.constant 97 : index
    %462 = memref.load %arg1[%c97] : memref<99xf32, #tpu.memory_space<smem>>
    %463 = vector.broadcast %462 : f32 to vector<1x256xf32>
    %464 = arith.mulf %463, %409 : vector<1x256xf32>
    %465 = arith.addf %461, %464 : vector<1x256xf32>
    %cst_56 = arith.constant 0.000000e+00 : f32
    %466 = vector.broadcast %cst_56 : f32 to vector<1x256xf32>
    %c3_i32 = arith.constant 3 : i32
    %467 = tpu.dynamic_rotate %417 by %c3_i32 dim 1 : vector<1x256xf32>, i32 -> vector<1x256xf32>
    %c7_57 = arith.constant 7 : index
    %c0_58 = arith.constant 0 : index
    %468 = vector.load %arg2[%c7_57, %c0_58] : memref<14x256xf32, #tpu.memory_space<vmem>>, vector<1x256xf32>
    %cst_59 = arith.constant 5.000000e-01 : f32
    %469 = vector.broadcast %cst_59 : f32 to vector<1x256xf32>
    %470 = arith.cmpf ogt, %468, %469 : vector<1x256xf32>
    %cst_60 = arith.constant 0.000000e+00 : f32
    %471 = vector.broadcast %cst_60 : f32 to vector<1x256xf32>
    %472 = arith.select %470, %467, %471 : vector<1x256xi1>, vector<1x256xf32>
    %473 = arith.addf %466, %472 : vector<1x256xf32>
    %c2_i32 = arith.constant 2 : i32
    %474 = tpu.dynamic_rotate %425 by %c2_i32 dim 1 : vector<1x256xf32>, i32 -> vector<1x256xf32>
    %c8_61 = arith.constant 8 : index
    %c0_62 = arith.constant 0 : index
    %475 = vector.load %arg2[%c8_61, %c0_62] : memref<14x256xf32, #tpu.memory_space<vmem>>, vector<1x256xf32>
    %cst_63 = arith.constant 5.000000e-01 : f32
    %476 = vector.broadcast %cst_63 : f32 to vector<1x256xf32>
    %477 = arith.cmpf ogt, %475, %476 : vector<1x256xf32>
    %cst_64 = arith.constant 0.000000e+00 : f32
    %478 = vector.broadcast %cst_64 : f32 to vector<1x256xf32>
    %479 = arith.select %477, %474, %478 : vector<1x256xi1>, vector<1x256xf32>
    %480 = arith.addf %473, %479 : vector<1x256xf32>
    %c1_i32 = arith.constant 1 : i32
    %481 = tpu.dynamic_rotate %433 by %c1_i32 dim 1 : vector<1x256xf32>, i32 -> vector<1x256xf32>
    %c9_65 = arith.constant 9 : index
    %c0_66 = arith.constant 0 : index
    %482 = vector.load %arg2[%c9_65, %c0_66] : memref<14x256xf32, #tpu.memory_space<vmem>>, vector<1x256xf32>
    %cst_67 = arith.constant 5.000000e-01 : f32
    %483 = vector.broadcast %cst_67 : f32 to vector<1x256xf32>
    %484 = arith.cmpf ogt, %482, %483 : vector<1x256xf32>
    %cst_68 = arith.constant 0.000000e+00 : f32
    %485 = vector.broadcast %cst_68 : f32 to vector<1x256xf32>
    %486 = arith.select %484, %481, %485 : vector<1x256xi1>, vector<1x256xf32>
    %487 = arith.addf %480, %486 : vector<1x256xf32>
    %c10_69 = arith.constant 10 : index
    %c0_70 = arith.constant 0 : index
    %488 = vector.load %arg2[%c10_69, %c0_70] : memref<14x256xf32, #tpu.memory_space<vmem>>, vector<1x256xf32>
    %cst_71 = arith.constant 5.000000e-01 : f32
    %489 = vector.broadcast %cst_71 : f32 to vector<1x256xf32>
    %490 = arith.cmpf ogt, %488, %489 : vector<1x256xf32>
    %cst_72 = arith.constant 0.000000e+00 : f32
    %491 = vector.broadcast %cst_72 : f32 to vector<1x256xf32>
    %492 = arith.select %490, %441, %491 : vector<1x256xi1>, vector<1x256xf32>
    %493 = arith.addf %487, %492 : vector<1x256xf32>
    %c255_i32 = arith.constant 255 : i32
    %494 = tpu.dynamic_rotate %449 by %c255_i32 dim 1 : vector<1x256xf32>, i32 -> vector<1x256xf32>
    %c11_73 = arith.constant 11 : index
    %c0_74 = arith.constant 0 : index
    %495 = vector.load %arg2[%c11_73, %c0_74] : memref<14x256xf32, #tpu.memory_space<vmem>>, vector<1x256xf32>
    %cst_75 = arith.constant 5.000000e-01 : f32
    %496 = vector.broadcast %cst_75 : f32 to vector<1x256xf32>
    %497 = arith.cmpf ogt, %495, %496 : vector<1x256xf32>
    %cst_76 = arith.constant 0.000000e+00 : f32
    %498 = vector.broadcast %cst_76 : f32 to vector<1x256xf32>
    %499 = arith.select %497, %494, %498 : vector<1x256xi1>, vector<1x256xf32>
    %500 = arith.addf %493, %499 : vector<1x256xf32>
    %c254_i32 = arith.constant 254 : i32
    %501 = tpu.dynamic_rotate %457 by %c254_i32 dim 1 : vector<1x256xf32>, i32 -> vector<1x256xf32>
    %c12_77 = arith.constant 12 : index
    %c0_78 = arith.constant 0 : index
    %502 = vector.load %arg2[%c12_77, %c0_78] : memref<14x256xf32, #tpu.memory_space<vmem>>, vector<1x256xf32>
    %cst_79 = arith.constant 5.000000e-01 : f32
    %503 = vector.broadcast %cst_79 : f32 to vector<1x256xf32>
    %504 = arith.cmpf ogt, %502, %503 : vector<1x256xf32>
    %cst_80 = arith.constant 0.000000e+00 : f32
    %505 = vector.broadcast %cst_80 : f32 to vector<1x256xf32>
    %506 = arith.select %504, %501, %505 : vector<1x256xi1>, vector<1x256xf32>
    %507 = arith.addf %500, %506 : vector<1x256xf32>
    %c253_i32 = arith.constant 253 : i32
    %508 = tpu.dynamic_rotate %465 by %c253_i32 dim 1 : vector<1x256xf32>, i32 -> vector<1x256xf32>
    %c13_81 = arith.constant 13 : index
    %c0_82 = arith.constant 0 : index
    %509 = vector.load %arg2[%c13_81, %c0_82] : memref<14x256xf32, #tpu.memory_space<vmem>>, vector<1x256xf32>
    %cst_83 = arith.constant 5.000000e-01 : f32
    %510 = vector.broadcast %cst_83 : f32 to vector<1x256xf32>
    %511 = arith.cmpf ogt, %509, %510 : vector<1x256xf32>
    %cst_84 = arith.constant 0.000000e+00 : f32
    %512 = vector.broadcast %cst_84 : f32 to vector<1x256xf32>
    %513 = arith.select %511, %508, %512 : vector<1x256xi1>, vector<1x256xf32>
    %514 = arith.addf %507, %513 : vector<1x256xf32>
    %c98 = arith.constant 98 : index
    %515 = memref.load %arg1[%c98] : memref<99xf32, #tpu.memory_space<smem>>
    %516 = vector.broadcast %515 : f32 to vector<1x256xf32>
    %517 = arith.addf %514, %516 : vector<1x256xf32>
    %518 = arith.negf %517 : vector<1x256xf32>
    %519 = math.exp %518 : vector<1x256xf32>
    %cst_85 = arith.constant 1.000000e+00 : f32
    %520 = vector.broadcast %cst_85 : f32 to vector<1x256xf32>
    %521 = arith.addf %520, %519 : vector<1x256xf32>
    %522 = arith.divf %520, %521 : vector<1x256xf32>
    %523 = vector.shape_cast %522 : vector<1x256xf32> to vector<1x1x256xf32>
    %c0_86 = arith.constant 0 : index
    %c0_87 = arith.constant 0 : index
    %c0_88 = arith.constant 0 : index
    %524 = vector.load %arg5[%c0_86, %c0_87, %c0_88] : memref<1x1x256xf32, #tpu.memory_space<vmem>>, vector<1x1x256xf32>
    tpu.vector_store %arg5[%c0_86, %c0_87, %c0_88], %523 {strides = array<i32>} : memref<1x1x256xf32, #tpu.memory_space<vmem>>, vector<1x1x256xf32>,
    %c0_89 = arith.constant 0 : index
    %c0_90 = arith.constant 0 : index
    %c0_91 = arith.constant 0 : index
    %525 = vector.load %arg3[%c0_89, %c0_90, %c0_91] : memref<1x4x256xf32, #tpu.memory_space<vmem>>, vector<1x4x256xf32>
    %526 = vector.shape_cast %522 : vector<1x256xf32> to vector<1x1x256xf32>
    %527 = vector.broadcast %526 : vector<1x1x256xf32> to vector<1x4x256xf32>
    %528 = arith.mulf %525, %527 : vector<1x4x256xf32>
    %c0_92 = arith.constant 0 : index
    %c0_93 = arith.constant 0 : index
    %c0_94 = arith.constant 0 : index
    %529 = vector.load %arg4[%c0_92, %c0_93, %c0_94] : memref<1x4x256xf32, #tpu.memory_space<vmem>>, vector<1x4x256xf32>
    tpu.vector_store %arg4[%c0_92, %c0_93, %c0_94], %528 {strides = array<i32>} : memref<1x4x256xf32, #tpu.memory_space<vmem>>, vector<1x4x256xf32>,
    return
  }
  func.func @transform_0(%arg0: i32) -> i32 {
    %c0_i32 = arith.constant 0 : i32
    %c0_i32_0 = arith.constant 0 : i32
    return %c0_i32 : i32
  }
  func.func @transform_1(%arg0: i32) -> (i32, i32) {
    %c0_i32 = arith.constant 0 : i32
    %c0_i32_0 = arith.constant 0 : i32
    %c0_i32_1 = arith.constant 0 : i32
    return %c0_i32, %c0_i32_0 : i32, i32
  }
  func.func @transform_2(%arg0: i32) -> (i32, i32, i32) {
    %c0_i32 = arith.constant 0 : i32
    %c0_i32_0 = arith.constant 0 : i32
    %c0_i32_1 = arith.constant 0 : i32
    return %arg0, %c0_i32, %c0_i32_0 : i32, i32, i32
  }
  func.func @transform_3(%arg0: i32) -> (i32, i32, i32) {
    %c0_i32 = arith.constant 0 : i32
    %c0_i32_0 = arith.constant 0 : i32
    %c0_i32_1 = arith.constant 0 : i32
    return %arg0, %c0_i32, %c0_i32_0 : i32, i32, i32
  }
  func.func @transform_4(%arg0: i32) -> (i32, i32, i32) {
    %c0_i32 = arith.constant 0 : i32
    %c0_i32_0 = arith.constant 0 : i32
    %c0_i32_1 = arith.constant 0 : i32
    return %arg0, %c0_i32, %c0_i32_0 : i32, i32, i32
  }
}

</mosaic_0001>

<llo_original>
// kernel: tpu_custom_call.1
$region0: #{tpu_custom_call.1}
  #allocation0 [shape = 'u32[]', space=smem, size = 0x4, offset = 0x4, fixed_abs, tag = 'smem constant byte address 0x4 - core index']
  #allocation1 [shape = 'u32[144,128]{1,0:T(1,128)}', space=vmem, size = 0x12000, scoped, tag = 'internal scratch']
  %s0 = inlined_call_operand.hbm [shape: f32[99], index: 0, kind: input, shape index: {}]
  %s1 = inlined_call_operand.hbm [shape: f32[14,256], index: 1, kind: input, shape index: {}]
  %s2 = inlined_call_operand.hbm [shape: f32[2,4,256], index: 2, kind: input, shape index: {}]
  %s3 = inlined_call_operand.hbm [shape: f32[2,4,256], index: 3, kind: output, shape index: {0}]
  %s4 = inlined_call_operand.hbm [shape: f32[2,1,256], index: 4, kind: output, shape index: {1}]
  %5 = xla_tuple %s3, %s4
  %s6 = sld [smem:[#allocation0]]
  $region65: #{tpu_custom_call.1} parent=0
    _
  %s8 = ssub.s32 1, %s6
  %s9 = scalar_select 0, %s8, %s6
  $region1: #{tpu_custom_call.1} parent=0
    #allocation2 [shape = 'u8[512]{0}', space=smem, size = 0x200, scoped, tag = 'input window, operand 0, single buffered']
    #allocation3 [shape = 's32[2]{0}', space=sflag, size = 0x8, scoped, tag = 'scoped memory for tpu_custom_call.1']
    #allocation4 [shape = 's32[2]{0}', space=sflag, size = 0x8, scoped, tag = 'scoped memory for tpu_custom_call.1']
    #allocation5 [shape = 's32[2]{0}', space=sflag, size = 0x8, scoped, tag = 'scoped memory for tpu_custom_call.1']
    #allocation6 [shape = 'u8[16384]{0}', space=vmem, size = 0x4000, scoped, tag = 'input window, operand 1, single buffered']
    #allocation7 [shape = 'u8[8192]{0}', space=vmem, size = 0x2000, scoped, tag = 'input window, operand 2']
    #allocation8 [shape = 's32[2]{0}', space=sflag, size = 0x8, scoped, tag = 'scoped memory for tpu_custom_call.1']
    #allocation9 [shape = 'u8[8192]{0}', space=vmem, size = 0x2000, scoped, tag = 'output window, operand 0']
    #allocation10 [shape = 'u8[2048]{0}', space=vmem, size = 0x800, scoped, tag = 'output window, operand 1']
    #allocation11 [shape = 's32[2]{0}', space=sflag, size = 0x8, scoped, tag = 'scoped memory for tpu_custom_call.1']
    %10 = vsyncpa [#allocation5], 0
    %11 = vsyncpa [#allocation3], 0
    %12 = vsyncpa [#allocation8], 0
    %s13 = scalar_lea.sflag [#allocation8], 1
    %14 = vsyncpa %s13, 0
    %15 = vsyncpa [#allocation4], 0
    %s16 = scalar_lea.sflag [#allocation4], 1
    %17 = vsyncpa %s16, 0
    %18 = vsyncpa [#allocation11], 0
    %s19 = scalar_lea.sflag [#allocation11], 1
    %20 = vsyncpa %s19, 0
    loop: start=0, step=1, limit=4
    $region2: #{tpu_custom_call.1} parent=1 // loop_pre_header
      _
    $region3: #{tpu_custom_call.1} parent=1 // loop_header
      %s22 = sphi 0, %s26
      %p23 = scmp.ge.s32.totalorder %s22, 4
      %s30 = sphi 0, %s30
      %s32 = sphi 0, %s30
      %s33 = sphi 0, %s32
      %s47 = sphi 0, %s33
      %s51 = sphi 0, %s51
      %s53 = sphi 0, %s51
      %s54 = sphi 0, %s53
      %s68 = sphi 0, %s54
      %s74 = sphi 0, %s76
      %s77 = sphi 0, %s74
      %s78 = sphi 0, %s77
      %s94 = sphi 0, %s78
      %s100 = sphi 0, %s102
      %s103 = sphi 0, %s100
      %s104 = sphi 0, %s103
      %s120 = sphi 0, %s104
      %s126 = sphi 0, %s128
      %s129 = sphi 0, %s126
      %s130 = sphi 0, %s129
      %s146 = sphi 0, %s130
    $region4: #{tpu_custom_call.1} parent=1 // loop_header_branch
      %25 = sbr.rel (%p23) target = $region8
    $region5: #{tpu_custom_call.1} parent=1 // loop_body
      %s27 = ssub.s32 %s22, 1
      %s28 = ssub.s32 %s22, 2
      %s29 = sadd.s32 %s22, 1
      %s31 = sadd.s32 %s30, 1
      %p34 = scmp.eq.s32.totalorder %s22, 1
      %p35 = scmp.ne.s32.totalorder %s30, %s32
      %p36 = scmp.eq.s32.totalorder %s22, 0
      %p37 = por %p35, %p36
      %p38 = scmp.ne.s32.totalorder %s30, %s32
      %p39 = scmp.eq.s32.totalorder %s27, 1
      %p40 = por %p38, %p39
      %p41 = scmp.ne.s32.totalorder %s32, %s33
      %p42 = scmp.eq.s32.totalorder %s27, 0
      %p43 = por %p41, %p42
      %p44 = scmp.ne.s32.totalorder %s32, %s33
      %p45 = scmp.eq.s32.totalorder %s28, 1
      %p46 = por %p44, %p45
      %p48 = scmp.ne.s32.totalorder %s33, %s47
      %p49 = scmp.eq.s32.totalorder %s28, 0
      %p50 = por %p48, %p49
      %s52 = sadd.s32 %s51, 1
      %p55 = scmp.eq.s32.totalorder %s22, 1
      %p56 = scmp.ne.s32.totalorder %s51, %s53
      %p57 = scmp.eq.s32.totalorder %s22, 0
      %p58 = por %p56, %p57
      %p59 = scmp.ne.s32.totalorder %s51, %s53
      %p60 = scmp.eq.s32.totalorder %s27, 1
      %p61 = por %p59, %p60
      %p62 = scmp.ne.s32.totalorder %s53, %s54
      %p63 = scmp.eq.s32.totalorder %s27, 0
      %p64 = por %p62, %p63
      %p65 = scmp.ne.s32.totalorder %s53, %s54
      %p66 = scmp.eq.s32.totalorder %s28, 1
      %p67 = por %p65, %p66
      %p69 = scmp.ne.s32.totalorder %s54, %s68
      %p70 = scmp.eq.s32.totalorder %s28, 0
      %p71 = por %p69, %p70
      %s72 = ssub.s32 %s22, %s29
      %p73 = scmp.eq.s32.totalorder %s72, 0
      %s75 = sadd.s32 %s74, 1
      %s76 = scalar_select %p73, %s74, %s75
      %p79 = pneg %p73
      %p80 = scmp.eq.s32.totalorder %s22, 1
      %p81 = por %p79, %p80
      %p82 = scmp.ne.s32.totalorder %s74, %s77
      %p83 = scmp.eq.s32.totalorder %s22, 0
      %p84 = por %p82, %p83
      %p85 = scmp.ne.s32.totalorder %s74, %s77
      %p86 = scmp.eq.s32.totalorder %s27, 1
      %p87 = por %p85, %p86
      %p88 = scmp.ne.s32.totalorder %s77, %s78
      %p89 = scmp.eq.s32.totalorder %s27, 0
      %p90 = por %p88, %p89
      %p91 = scmp.ne.s32.totalorder %s77, %s78
      %p92 = scmp.eq.s32.totalorder %s28, 1
      %p93 = por %p91, %p92
      %p95 = scmp.ne.s32.totalorder %s78, %s94
      %p96 = scmp.eq.s32.totalorder %s28, 0
      %p97 = por %p95, %p96
      %s98 = ssub.s32 %s22, %s29
      %p99 = scmp.eq.s32.totalorder %s98, 0
      %s101 = sadd.s32 %s100, 1
      %s102 = scalar_select %p99, %s100, %s101
      %p105 = pneg %p99
      %p106 = scmp.eq.s32.totalorder %s22, 1
      %p107 = por %p105, %p106
      %p108 = scmp.ne.s32.totalorder %s100, %s103
      %p109 = scmp.eq.s32.totalorder %s22, 0
      %p110 = por %p108, %p109
      %p111 = scmp.ne.s32.totalorder %s100, %s103
      %p112 = scmp.eq.s32.totalorder %s27, 1
      %p113 = por %p111, %p112
      %p114 = scmp.ne.s32.totalorder %s103, %s104
      %p115 = scmp.eq.s32.totalorder %s27, 0
      %p116 = por %p114, %p115
      %p117 = scmp.ne.s32.totalorder %s103, %s104
      %p118 = scmp.eq.s32.totalorder %s28, 1
      %p119 = por %p117, %p118
      %p121 = scmp.ne.s32.totalorder %s104, %s120
      %p122 = scmp.eq.s32.totalorder %s28, 0
      %p123 = por %p121, %p122
      %s124 = ssub.s32 %s22, %s29
      %p125 = scmp.eq.s32.totalorder %s124, 0
      %s127 = sadd.s32 %s126, 1
      %s128 = scalar_select %p125, %s126, %s127
      %p131 = pneg %p125
      %p132 = scmp.eq.s32.totalorder %s22, 1
      %p133 = por %p131, %p132
      %p134 = scmp.ne.s32.totalorder %s126, %s129
      %p135 = scmp.eq.s32.totalorder %s22, 0
      %p136 = por %p134, %p135
      %p137 = scmp.ne.s32.totalorder %s126, %s129
      %p138 = scmp.eq.s32.totalorder %s27, 1
      %p139 = por %p137, %p138
      %p140 = scmp.ne.s32.totalorder %s129, %s130
      %p141 = scmp.eq.s32.totalorder %s27, 0
      %p142 = por %p140, %p141
      %p143 = scmp.ne.s32.totalorder %s129, %s130
      %p144 = scmp.eq.s32.totalorder %s28, 1
      %p145 = por %p143, %p144
      %p147 = scmp.ne.s32.totalorder %s130, %s146
      %p148 = scmp.eq.s32.totalorder %s28, 0
      %p149 = por %p147, %p148
      %p150 = scmp.le.s32.totalorder 1, %s22
      %p151 = scmp.lt.s32.totalorder %s22, 3
      %p152 = pnand %p150, %p151
      %p153 = pneg %p152
      // Predicated region
      $region9: #{tpu_custom_call.1} parent=5 // pred_check
        _
      $region10: #{tpu_custom_call.1} parent=5 // pred_check_branch
        %155 = sbr.rel (%p152) target = $region12
      $region11: #{tpu_custom_call.1} parent=5 // pred_region
        %s156 = ssub.s32 %s22, 1
        // Predicated region
        $region13: #{tpu_custom_call.1} parent=11 // pred_check
          %p157 = pneg %p43
        $region14: #{tpu_custom_call.1} parent=11 // pred_check_branch
          %159 = sbr.rel (%p157) target = $region16
        $region15: #{tpu_custom_call.1} parent=11 // pred_region
          %s161 = ssub.s32 16, 16
          %162 = vsyncadd [#allocation5], %s161
          %165 = dma.hbm_to_smem %s0, 16, [#allocation2], [#allocation5]
        $region16: #{tpu_custom_call.1} parent=11 // pred_fallthru
          _
        // Predicated region
        $region17: #{tpu_custom_call.1} parent=11 // pred_check
          %p166 = pneg %p64
        $region18: #{tpu_custom_call.1} parent=11 // pred_check_branch
          %168 = sbr.rel (%p166) target = $region20
        $region19: #{tpu_custom_call.1} parent=11 // pred_region
          %s170 = ssub.s32 512, 512
          %171 = vsyncadd [#allocation3], %s170
          %s172 = sshll.u32 [#allocation6], 4
          %s173 = int_to_ptr.vmem [resolvable:$true] %s172
          %178 = dma.hbm_to_vmem [thread:$0]  %s1, 512, %s173, [#allocation3], 256, 256, 16
        $region20: #{tpu_custom_call.1} parent=11 // pred_fallthru
          _
      $region12: #{tpu_custom_call.1} parent=5 // pred_fallthru
        _
      %p179 = scmp.lt.s32.totalorder %s22, 2
      // Predicated region
      $region21: #{tpu_custom_call.1} parent=5 // pred_check
        %p180 = pneg %p179
      $region22: #{tpu_custom_call.1} parent=5 // pred_check_branch
        %182 = sbr.rel (%p180) target = $region24
      $region23: #{tpu_custom_call.1} parent=5 // pred_region
        // Predicated region
        $region25: #{tpu_custom_call.1} parent=23 // pred_check
          %p183 = pneg %p84
        $region26: #{tpu_custom_call.1} parent=23 // pred_check_branch
          %185 = sbr.rel (%p183) target = $region28
        $region27: #{tpu_custom_call.1} parent=23 // pred_region
          %s186 = sand.u32 %s74, 1
          %s187 = scalar_lea.sflag [#allocation8], %s186
          %s188 = sand.u32 %s74, 1
          %s189 = smul.addr %s188, 8
          %s190 = scalar_lea.vmem [#allocation7], %s189
          %s192 = ssub.s32 128, 128
          %193 = vsyncadd %s187, %s192
          %s194 = smul.addr %s22, 2
          %s195 = smul.addr %s194, 64
          %s196 = scalar_lea.hbm %s2, %s195
          %s198 = sshll.u32 %s190, 4
          %s199 = int_to_ptr.vmem [resolvable:$true] %s198
          %201 = dma.hbm_to_vmem [thread:$0]  %s196, 128, %s199, %s187
        $region28: #{tpu_custom_call.1} parent=23 // pred_fallthru
          _
      $region24: #{tpu_custom_call.1} parent=5 // pred_fallthru
        _
      %p202 = scmp.le.s32.totalorder 1, %s22
      %p203 = scmp.lt.s32.totalorder %s22, 3
      %p204 = pnand %p202, %p203
      %p205 = pneg %p204
      // Predicated region
      $region29: #{tpu_custom_call.1} parent=5 // pred_check
        _
      $region30: #{tpu_custom_call.1} parent=5 // pred_check_branch
        %207 = sbr.rel (%p204) target = $region32
      $region31: #{tpu_custom_call.1} parent=5 // pred_region
        %s208 = ssub.s32 %s22, 1
        // Predicated region
        $region33: #{tpu_custom_call.1} parent=31 // pred_check
          %p209 = pneg %p43
        $region34: #{tpu_custom_call.1} parent=31 // pred_check_branch
          %211 = sbr.rel (%p209) target = $region36
        $region35: #{tpu_custom_call.1} parent=31 // pred_region
          %212 = dma.done [#allocation5], 16
        $region36: #{tpu_custom_call.1} parent=31 // pred_fallthru
          _
        // Predicated region
        $region37: #{tpu_custom_call.1} parent=31 // pred_check
          %p213 = pneg %p64
        $region38: #{tpu_custom_call.1} parent=31 // pred_check_branch
          %215 = sbr.rel (%p213) target = $region40
        $region39: #{tpu_custom_call.1} parent=31 // pred_region
          %216 = dma.done [#allocation3], 512
        $region40: #{tpu_custom_call.1} parent=31 // pred_fallthru
          _
        %s217 = sand.u32 %s77, 1
        %s218 = scalar_lea.sflag [#allocation8], %s217
        %s219 = sand.u32 %s77, 1
        %s220 = smul.addr %s219, 8
        %s221 = scalar_lea.vmem [#allocation7], %s220
        // Predicated region
        $region41: #{tpu_custom_call.1} parent=31 // pred_check
          %p222 = pneg %p90
        $region42: #{tpu_custom_call.1} parent=31 // pred_check_branch
          %224 = sbr.rel (%p222) target = $region44
        $region43: #{tpu_custom_call.1} parent=31 // pred_region
          %225 = dma.done %s218, 128
        $region44: #{tpu_custom_call.1} parent=31 // pred_fallthru
          _
        %226 = sfence
        %p227 = pneg %p43
        %p228 = pneg %p40
        %p229 = pneg %p64
        %p230 = pneg %p61
        %s231 = sand.u32 %s77, 1
        %s232 = scalar_lea.sflag [#allocation8], %s231
        %s233 = sand.u32 %s77, 1
        %s234 = smul.addr %s233, 8
        %s235 = scalar_lea.vmem [#allocation7], %s234
        %p236 = pneg %p90
        %p237 = pneg %p87
        %p238 = pneg %p116
        %p239 = pneg %p113
        %s240 = sand.u32 %s103, 1
        %s241 = scalar_lea.sflag [#allocation4], %s240
        %s242 = sand.u32 %s103, 1
        %s243 = smul.addr %s242, 8
        %s244 = scalar_lea.vmem [#allocation9], %s243
        %p245 = pneg %p142
        %p246 = pneg %p139
        %s247 = sand.u32 %s129, 1
        %s248 = scalar_lea.sflag [#allocation11], %s247
        %s249 = sand.u32 %s129, 1
        %s250 = smul.addr %s249, 2
        %s251 = scalar_lea.vmem [#allocation10], %s250
        %v252 = vld [vmem:[%s221] sm:$0xff]
        %v254 = vcombine.high %v252, %v252
        %vm256 = vcmask 1043456
        %v257 = vsel %vm256, %v252, -inf
        %v258 = vrot.slane %v257, 4
        %v259 = vmax.f32 %v257, %v258
        %v260 = vrot.slane %v259, 2
        %v261 = vmax.f32 %v259, %v260
        %v262 = vrot.slane %v261, 1
        %v263 = vmax.f32 %v261, %v262
        %v264 = vsel %vm256, %v254, -inf
        %v265 = vrot.slane %v264, 4
        %v266 = vmax.f32 %v264, %v265
        %v267 = vrot.slane %v266, 2
        %v268 = vmax.f32 %v266, %v267
        %v269 = vrot.slane %v268, 1
        %v270 = vmax.f32 %v268, %v269
        %v271 = vsel %vm256, %v252, 0.0
        %v272 = vrot.slane %v271, 4
        %v273 = vadd.f32 %v271, %v272
        %v274 = vrot.slane %v273, 2
        %v275 = vadd.f32 %v273, %v274
        %v276 = vrot.slane %v275, 1
        %v277 = vadd.f32 %v275, %v276
        %v278 = vsel %vm256, %v254, 0.0
        %v279 = vrot.slane %v278, 4
        %v280 = vadd.f32 %v278, %v279
        %v281 = vrot.slane %v280, 2
        %v282 = vadd.f32 %v280, %v281
        %v283 = vrot.slane %v282, 1
        %v284 = vadd.f32 %v282, %v283
        %v285 = vmul.f32 %v277, 0.25
        %v286 = vmul.f32 %v284, 0.25
        %287 = vrot.lane.b32.xlu0 %v263, 48
        %v288 = vpop.permute.xlu0 %287
        %289 = vrot.lane.b32.xlu0 %v270, 48
        %v290 = vpop.permute.xlu0 %289
        %v291 = vlaneseq
        %v292 = vand.u32 %v291, 127
        %vm293 = vcmp.lt.s32.totalorder %v292, 48
        %v294 = vsel %vm293, %v288, %v290
        %v295 = vsel %vm293, %v290, %v288
        %296 = vrot.lane.b32.xlu0 %v285, 48
        %v297 = vpop.permute.xlu0 %296
        %298 = vrot.lane.b32.xlu0 %v286, 48
        %v299 = vpop.permute.xlu0 %298
        %v300 = vsel %vm293, %v297, %v299
        %v301 = vsel %vm293, %v299, %v297
        %v302 = vld [vmem:[#allocation6] ss:$8 sm:$0x3]
        %vm303 = vcmp.gt.f32.partialorder %v302, 0.5
        %v306 = vcombine.low %v295, %v294
        %v308 = vunpack.c.l.s4 1966171168
        %v309 = vunpack.c.0.s8 %v308
        %v310 = vlaneseq
        %v311 = vshrl.u32 %v310, 7
        %v312 = vsub.s32 %v309, %v311
        %v313 = vrot.slane %v306, %v312
        %v315 = vunpack.c.l.s4 1966171168
        %v316 = vunpack.c.0.s8 %v315
        %v317 = vlaneseq
        %v318 = vshrl.u32 %v317, 7
        %v319 = vsub.s32 %v316, %v318
        %v320 = vrot.slane %v313, %v319
        %v322 = vsel %vm303, %v320, 0.0
        %v325 = vcombine.low %v301, %v300
        %v327 = vunpack.c.l.s4 1966171168
        %v328 = vunpack.c.0.s8 %v327
        %v329 = vlaneseq
        %v330 = vshrl.u32 %v329, 7
        %v331 = vsub.s32 %v328, %v330
        %v332 = vrot.slane %v325, %v331
        %v334 = vunpack.c.l.s4 1966171168
        %v335 = vunpack.c.0.s8 %v334
        %v336 = vlaneseq
        %v337 = vshrl.u32 %v336, 7
        %v338 = vsub.s32 %v335, %v337
        %v339 = vrot.slane %v332, %v338
        %v341 = vsel %vm303, %v339, 0.0
        %s342 = sld [smem:[#allocation2]]
        %v343 = vstv %s342
        %v344 = vmul.f32 %v343, %v322
        %v345 = vadd.f32 %v344, 0.0
        %s346 = sld [smem:[#allocation2 + $0x31]]
        %v347 = vstv %s346
        %v348 = vmul.f32 %v347, %v341
        %v349 = vadd.f32 %v345, %v348
        %s350 = sld [smem:[#allocation2 + $0x1]]
        %v351 = vstv %s350
        %v352 = vmul.f32 %v351, %v322
        %v353 = vadd.f32 %v352, 0.0
        %s354 = sld [smem:[#allocation2 + $0x32]]
        %v355 = vstv %s354
        %v356 = vmul.f32 %v355, %v341
        %v357 = vadd.f32 %v353, %v356
        %s358 = sld [smem:[#allocation2 + $0x2]]
        %v359 = vstv %s358
        %v360 = vmul.f32 %v359, %v322
        %v361 = vadd.f32 %v360, 0.0
        %s362 = sld [smem:[#allocation2 + $0x33]]
        %v363 = vstv %s362
        %v364 = vmul.f32 %v363, %v341
        %v365 = vadd.f32 %v361, %v364
        %s366 = sld [smem:[#allocation2 + $0x3]]
        %v367 = vstv %s366
        %v368 = vmul.f32 %v367, %v322
        %v369 = vadd.f32 %v368, 0.0
        %s370 = sld [smem:[#allocation2 + $0x34]]
        %v371 = vstv %s370
        %v372 = vmul.f32 %v371, %v341
        %v373 = vadd.f32 %v369, %v372
        %s374 = sld [smem:[#allocation2 + $0x4]]
        %v375 = vstv %s374
        %v376 = vmul.f32 %v375, %v322
        %v377 = vadd.f32 %v376, 0.0
        %s378 = sld [smem:[#allocation2 + $0x35]]
        %v379 = vstv %s378
        %v380 = vmul.f32 %v379, %v341
        %v381 = vadd.f32 %v377, %v380
        %s382 = sld [smem:[#allocation2 + $0x5]]
        %v383 = vstv %s382
        %v384 = vmul.f32 %v383, %v322
        %v385 = vadd.f32 %v384, 0.0
        %s386 = sld [smem:[#allocation2 + $0x36]]
        %v387 = vstv %s386
        %v388 = vmul.f32 %v387, %v341
        %v389 = vadd.f32 %v385, %v388
        %s390 = sld [smem:[#allocation2 + $0x6]]
        %v391 = vstv %s390
        %v392 = vmul.f32 %v391, %v322
        %v393 = vadd.f32 %v392, 0.0
        %s394 = sld [smem:[#allocation2 + $0x37]]
        %v395 = vstv %s394
        %v396 = vmul.f32 %v395, %v341
        %v397 = vadd.f32 %v393, %v396
        %398 = vrot.lane.b32.xlu0 %v263, 32
        %v399 = vpop.permute.xlu0 %398
        %400 = vrot.lane.b32.xlu0 %v270, 32
        %v401 = vpop.permute.xlu0 %400
        %vm402 = vcmp.lt.s32.totalorder %v292, 32
        %v403 = vsel %vm402, %v399, %v401
        %v404 = vsel %vm402, %v401, %v399
        %405 = vrot.lane.b32.xlu0 %v285, 32
        %v406 = vpop.permute.xlu0 %405
        %407 = vrot.lane.b32.xlu0 %v286, 32
        %v408 = vpop.permute.xlu0 %407
        %v409 = vsel %vm402, %v406, %v408
        %v410 = vsel %vm402, %v408, %v406
        %s411 = scalar_lea.vmem [#allocation6], 1
        %v412 = vld [vmem:[%s411] ss:$8 sm:$0x3]
        %vm413 = vcmp.gt.f32.partialorder %v412, 0.5
        %v416 = vcombine.low %v404, %v403
        %v418 = vunpack.c.l.s4 1966171168
        %v419 = vunpack.c.0.s8 %v418
        %v420 = vlaneseq
        %v421 = vshrl.u32 %v420, 7
        %v422 = vsub.s32 %v419, %v421
        %v423 = vrot.slane %v416, %v422
        %v425 = vunpack.c.l.s4 1966171168
        %v426 = vunpack.c.0.s8 %v425
        %v427 = vlaneseq
        %v428 = vshrl.u32 %v427, 7
        %v429 = vsub.s32 %v426, %v428
        %v430 = vrot.slane %v423, %v429
        %v432 = vsel %vm413, %v430, 0.0
        %v435 = vcombine.low %v410, %v409
        %v437 = vunpack.c.l.s4 1966171168
        %v438 = vunpack.c.0.s8 %v437
        %v439 = vlaneseq
        %v440 = vshrl.u32 %v439, 7
        %v441 = vsub.s32 %v438, %v440
        %v442 = vrot.slane %v435, %v441
        %v444 = vunpack.c.l.s4 1966171168
        %v445 = vunpack.c.0.s8 %v444
        %v446 = vlaneseq
        %v447 = vshrl.u32 %v446, 7
        %v448 = vsub.s32 %v445, %v447
        %v449 = vrot.slane %v442, %v448
        %v451 = vsel %vm413, %v449, 0.0
        %s452 = sld [smem:[#allocation2 + $0x7]]
        %v453 = vstv %s452
        %v454 = vmul.f32 %v453, %v432
        %v455 = vadd.f32 %v349, %v454
        %s456 = sld [smem:[#allocation2 + $0x38]]
        %v457 = vstv %s456
        %v458 = vmul.f32 %v457, %v451
        %v459 = vadd.f32 %v455, %v458
        %s460 = sld [smem:[#allocation2 + $0x8]]
        %v461 = vstv %s460
        %v462 = vmul.f32 %v461, %v432
        %v463 = vadd.f32 %v357, %v462
        %s464 = sld [smem:[#allocation2 + $0x39]]
        %v465 = vstv %s464
        %v466 = vmul.f32 %v465, %v451
        %v467 = vadd.f32 %v463, %v466
        %s468 = sld [smem:[#allocation2 + $0x9]]
        %v469 = vstv %s468
        %v470 = vmul.f32 %v469, %v432
        %v471 = vadd.f32 %v365, %v470
        %s472 = sld [smem:[#allocation2 + $0x3a]]
        %v473 = vstv %s472
        %v474 = vmul.f32 %v473, %v451
        %v475 = vadd.f32 %v471, %v474
        %s476 = sld [smem:[#allocation2 + $0xa]]
        %v477 = vstv %s476
        %v478 = vmul.f32 %v477, %v432
        %v479 = vadd.f32 %v373, %v478
        %s480 = sld [smem:[#allocation2 + $0x3b]]
        %v481 = vstv %s480
        %v482 = vmul.f32 %v481, %v451
        %v483 = vadd.f32 %v479, %v482
        %s484 = sld [smem:[#allocation2 + $0xb]]
        %v485 = vstv %s484
        %v486 = vmul.f32 %v485, %v432
        %v487 = vadd.f32 %v381, %v486
        %s488 = sld [smem:[#allocation2 + $0x3c]]
        %v489 = vstv %s488
        %v490 = vmul.f32 %v489, %v451
        %v491 = vadd.f32 %v487, %v490
        %s492 = sld [smem:[#allocation2 + $0xc]]
        %v493 = vstv %s492
        %v494 = vmul.f32 %v493, %v432
        %v495 = vadd.f32 %v389, %v494
        %s496 = sld [smem:[#allocation2 + $0x3d]]
        %v497 = vstv %s496
        %v498 = vmul.f32 %v497, %v451
        %v499 = vadd.f32 %v495, %v498
        %s500 = sld [smem:[#allocation2 + $0xd]]
        %v501 = vstv %s500
        %v502 = vmul.f32 %v501, %v432
        %v503 = vadd.f32 %v397, %v502
        %s504 = sld [smem:[#allocation2 + $0x3e]]
        %v505 = vstv %s504
        %v506 = vmul.f32 %v505, %v451
        %v507 = vadd.f32 %v503, %v506
        %508 = vrot.lane.b32.xlu0 %v263, 16
        %v509 = vpop.permute.xlu0 %508
        %510 = vrot.lane.b32.xlu0 %v270, 16
        %v511 = vpop.permute.xlu0 %510
        %vm512 = vcmp.lt.s32.totalorder %v292, 16
        %v513 = vsel %vm512, %v509, %v511
        %v514 = vsel %vm512, %v511, %v509
        %515 = vrot.lane.b32.xlu0 %v285, 16
        %v516 = vpop.permute.xlu0 %515
        %517 = vrot.lane.b32.xlu0 %v286, 16
        %v518 = vpop.permute.xlu0 %517
        %v519 = vsel %vm512, %v516, %v518
        %v520 = vsel %vm512, %v518, %v516
        %s521 = scalar_lea.vmem [#allocation6], 2
        %v522 = vld [vmem:[%s521] ss:$8 sm:$0x3]
        %vm523 = vcmp.gt.f32.partialorder %v522, 0.5
        %v526 = vcombine.low %v514, %v513
        %v528 = vunpack.c.l.s4 1966171168
        %v529 = vunpack.c.0.s8 %v528
        %v530 = vlaneseq
        %v531 = vshrl.u32 %v530, 7
        %v532 = vsub.s32 %v529, %v531
        %v533 = vrot.slane %v526, %v532
        %v535 = vunpack.c.l.s4 1966171168
        %v536 = vunpack.c.0.s8 %v535
        %v537 = vlaneseq
        %v538 = vshrl.u32 %v537, 7
        %v539 = vsub.s32 %v536, %v538
        %v540 = vrot.slane %v533, %v539
        %v542 = vsel %vm523, %v540, 0.0
        %v545 = vcombine.low %v520, %v519
        %v547 = vunpack.c.l.s4 1966171168
        %v548 = vunpack.c.0.s8 %v547
        %v549 = vlaneseq
        %v550 = vshrl.u32 %v549, 7
        %v551 = vsub.s32 %v548, %v550
        %v552 = vrot.slane %v545, %v551
        %v554 = vunpack.c.l.s4 1966171168
        %v555 = vunpack.c.0.s8 %v554
        %v556 = vlaneseq
        %v557 = vshrl.u32 %v556, 7
        %v558 = vsub.s32 %v555, %v557
        %v559 = vrot.slane %v552, %v558
        %v561 = vsel %vm523, %v559, 0.0
        %s562 = sld [smem:[#allocation2 + $0xe]]
        %v563 = vstv %s562
        %v564 = vmul.f32 %v563, %v542
        %v565 = vadd.f32 %v459, %v564
        %s566 = sld [smem:[#allocation2 + $0x3f]]
        %v567 = vstv %s566
        %v568 = vmul.f32 %v567, %v561
        %v569 = vadd.f32 %v565, %v568
        %s570 = sld [smem:[#allocation2 + $0xf]]
        %v571 = vstv %s570
        %v572 = vmul.f32 %v571, %v542
        %v573 = vadd.f32 %v467, %v572
        %s574 = sld [smem:[#allocation2 + $0x40]]
        %v575 = vstv %s574
        %v576 = vmul.f32 %v575, %v561
        %v577 = vadd.f32 %v573, %v576
        %s578 = sld [smem:[#allocation2 + $0x10]]
        %v579 = vstv %s578
        %v580 = vmul.f32 %v579, %v542
        %v581 = vadd.f32 %v475, %v580
        %s582 = sld [smem:[#allocation2 + $0x41]]
        %v583 = vstv %s582
        %v584 = vmul.f32 %v583, %v561
        %v585 = vadd.f32 %v581, %v584
        %s586 = sld [smem:[#allocation2 + $0x11]]
        %v587 = vstv %s586
        %v588 = vmul.f32 %v587, %v542
        %v589 = vadd.f32 %v483, %v588
        %s590 = sld [smem:[#allocation2 + $0x42]]
        %v591 = vstv %s590
        %v592 = vmul.f32 %v591, %v561
        %v593 = vadd.f32 %v589, %v592
        %s594 = sld [smem:[#allocation2 + $0x12]]
        %v595 = vstv %s594
        %v596 = vmul.f32 %v595, %v542
        %v597 = vadd.f32 %v491, %v596
        %s598 = sld [smem:[#allocation2 + $0x43]]
        %v599 = vstv %s598
        %v600 = vmul.f32 %v599, %v561
        %v601 = vadd.f32 %v597, %v600
        %s602 = sld [smem:[#allocation2 + $0x13]]
        %v603 = vstv %s602
        %v604 = vmul.f32 %v603, %v542
        %v605 = vadd.f32 %v499, %v604
        %s606 = sld [smem:[#allocation2 + $0x44]]
        %v607 = vstv %s606
        %v608 = vmul.f32 %v607, %v561
        %v609 = vadd.f32 %v605, %v608
        %s610 = sld [smem:[#allocation2 + $0x14]]
        %v611 = vstv %s610
        %v612 = vmul.f32 %v611, %v542
        %v613 = vadd.f32 %v507, %v612
        %s614 = sld [smem:[#allocation2 + $0x45]]
        %v615 = vstv %s614
        %v616 = vmul.f32 %v615, %v561
        %v617 = vadd.f32 %v613, %v616
        %s618 = scalar_lea.vmem [#allocation6], 3
        %v619 = vld [vmem:[%s618] ss:$8 sm:$0x3]
        %vm620 = vcmp.gt.f32.partialorder %v619, 0.5
        %v623 = vcombine.low %v263, %v270
        %v625 = vunpack.c.l.s4 1966171168
        %v626 = vunpack.c.0.s8 %v625
        %v627 = vlaneseq
        %v628 = vshrl.u32 %v627, 7
        %v629 = vsub.s32 %v626, %v628
        %v630 = vrot.slane %v623, %v629
        %v632 = vunpack.c.l.s4 1966171168
        %v633 = vunpack.c.0.s8 %v632
        %v634 = vlaneseq
        %v635 = vshrl.u32 %v634, 7
        %v636 = vsub.s32 %v633, %v635
        %v637 = vrot.slane %v630, %v636
        %v639 = vsel %vm620, %v637, 0.0
        %v642 = vcombine.low %v285, %v286
        %v644 = vunpack.c.l.s4 1966171168
        %v645 = vunpack.c.0.s8 %v644
        %v646 = vlaneseq
        %v647 = vshrl.u32 %v646, 7
        %v648 = vsub.s32 %v645, %v647
        %v649 = vrot.slane %v642, %v648
        %v651 = vunpack.c.l.s4 1966171168
        %v652 = vunpack.c.0.s8 %v651
        %v653 = vlaneseq
        %v654 = vshrl.u32 %v653, 7
        %v655 = vsub.s32 %v652, %v654
        %v656 = vrot.slane %v649, %v655
        %v658 = vsel %vm620, %v656, 0.0
        %s659 = sld [smem:[#allocation2 + $0x15]]
        %v660 = vstv %s659
        %v661 = vmul.f32 %v660, %v639
        %v662 = vadd.f32 %v569, %v661
        %s663 = sld [smem:[#allocation2 + $0x46]]
        %v664 = vstv %s663
        %v665 = vmul.f32 %v664, %v658
        %v666 = vadd.f32 %v662, %v665
        %s667 = sld [smem:[#allocation2 + $0x16]]
        %v668 = vstv %s667
        %v669 = vmul.f32 %v668, %v639
        %v670 = vadd.f32 %v577, %v669
        %s671 = sld [smem:[#allocation2 + $0x47]]
        %v672 = vstv %s671
        %v673 = vmul.f32 %v672, %v658
        %v674 = vadd.f32 %v670, %v673
        %s675 = sld [smem:[#allocation2 + $0x17]]
        %v676 = vstv %s675
        %v677 = vmul.f32 %v676, %v639
        %v678 = vadd.f32 %v585, %v677
        %s679 = sld [smem:[#allocation2 + $0x48]]
        %v680 = vstv %s679
        %v681 = vmul.f32 %v680, %v658
        %v682 = vadd.f32 %v678, %v681
        %s683 = sld [smem:[#allocation2 + $0x18]]
        %v684 = vstv %s683
        %v685 = vmul.f32 %v684, %v639
        %v686 = vadd.f32 %v593, %v685
        %s687 = sld [smem:[#allocation2 + $0x49]]
        %v688 = vstv %s687
        %v689 = vmul.f32 %v688, %v658
        %v690 = vadd.f32 %v686, %v689
        %s691 = sld [smem:[#allocation2 + $0x19]]
        %v692 = vstv %s691
        %v693 = vmul.f32 %v692, %v639
        %v694 = vadd.f32 %v601, %v693
        %s695 = sld [smem:[#allocation2 + $0x4a]]
        %v696 = vstv %s695
        %v697 = vmul.f32 %v696, %v658
        %v698 = vadd.f32 %v694, %v697
        %s699 = sld [smem:[#allocation2 + $0x1a]]
        %v700 = vstv %s699
        %v701 = vmul.f32 %v700, %v639
        %v702 = vadd.f32 %v609, %v701
        %s703 = sld [smem:[#allocation2 + $0x4b]]
        %v704 = vstv %s703
        %v705 = vmul.f32 %v704, %v658
        %v706 = vadd.f32 %v702, %v705
        %s707 = sld [smem:[#allocation2 + $0x1b]]
        %v708 = vstv %s707
        %v709 = vmul.f32 %v708, %v639
        %v710 = vadd.f32 %v617, %v709
        %s711 = sld [smem:[#allocation2 + $0x4c]]
        %v712 = vstv %s711
        %v713 = vmul.f32 %v712, %v658
        %v714 = vadd.f32 %v710, %v713
        %715 = vrot.lane.b32.xlu0 %v263, 112
        %v716 = vpop.permute.xlu0 %715
        %717 = vrot.lane.b32.xlu0 %v270, 112
        %v718 = vpop.permute.xlu0 %717
        %vm719 = vcmp.lt.s32.totalorder %v292, 112
        %v720 = vsel %vm719, %v716, %v718
        %v721 = vsel %vm719, %v718, %v716
        %722 = vrot.lane.b32.xlu0 %v285, 112
        %v723 = vpop.permute.xlu0 %722
        %724 = vrot.lane.b32.xlu0 %v286, 112
        %v725 = vpop.permute.xlu0 %724
        %v726 = vsel %vm719, %v723, %v725
        %v727 = vsel %vm719, %v725, %v723
        %s728 = scalar_lea.vmem [#allocation6], 4
        %v729 = vld [vmem:[%s728] ss:$8 sm:$0x3]
        %vm730 = vcmp.gt.f32.partialorder %v729, 0.5
        %v733 = vcombine.low %v720, %v721
        %v735 = vunpack.c.l.s4 1966171168
        %v736 = vunpack.c.0.s8 %v735
        %v737 = vlaneseq
        %v738 = vshrl.u32 %v737, 7
        %v739 = vsub.s32 %v736, %v738
        %v740 = vrot.slane %v733, %v739
        %v742 = vunpack.c.l.s4 1966171168
        %v743 = vunpack.c.0.s8 %v742
        %v744 = vlaneseq
        %v745 = vshrl.u32 %v744, 7
        %v746 = vsub.s32 %v743, %v745
        %v747 = vrot.slane %v740, %v746
        %v749 = vsel %vm730, %v747, 0.0
        %v752 = vcombine.low %v726, %v727
        %v754 = vunpack.c.l.s4 1966171168
        %v755 = vunpack.c.0.s8 %v754
        %v756 = vlaneseq
        %v757 = vshrl.u32 %v756, 7
        %v758 = vsub.s32 %v755, %v757
        %v759 = vrot.slane %v752, %v758
        %v761 = vunpack.c.l.s4 1966171168
        %v762 = vunpack.c.0.s8 %v761
        %v763 = vlaneseq
        %v764 = vshrl.u32 %v763, 7
        %v765 = vsub.s32 %v762, %v764
        %v766 = vrot.slane %v759, %v765
        %v768 = vsel %vm730, %v766, 0.0
        %s769 = sld [smem:[#allocation2 + $0x1c]]
        %v770 = vstv %s769
        %v771 = vmul.f32 %v770, %v749
        %v772 = vadd.f32 %v666, %v771
        %s773 = sld [smem:[#allocation2 + $0x4d]]
        %v774 = vstv %s773
        %v775 = vmul.f32 %v774, %v768
        %v776 = vadd.f32 %v772, %v775
        %s777 = sld [smem:[#allocation2 + $0x1d]]
        %v778 = vstv %s777
        %v779 = vmul.f32 %v778, %v749
        %v780 = vadd.f32 %v674, %v779
        %s781 = sld [smem:[#allocation2 + $0x4e]]
        %v782 = vstv %s781
        %v783 = vmul.f32 %v782, %v768
        %v784 = vadd.f32 %v780, %v783
        %s785 = sld [smem:[#allocation2 + $0x1e]]
        %v786 = vstv %s785
        %v787 = vmul.f32 %v786, %v749
        %v788 = vadd.f32 %v682, %v787
        %s789 = sld [smem:[#allocation2 + $0x4f]]
        %v790 = vstv %s789
        %v791 = vmul.f32 %v790, %v768
        %v792 = vadd.f32 %v788, %v791
        %s793 = sld [smem:[#allocation2 + $0x1f]]
        %v794 = vstv %s793
        %v795 = vmul.f32 %v794, %v749
        %v796 = vadd.f32 %v690, %v795
        %s797 = sld [smem:[#allocation2 + $0x50]]
        %v798 = vstv %s797
        %v799 = vmul.f32 %v798, %v768
        %v800 = vadd.f32 %v796, %v799
        %s801 = sld [smem:[#allocation2 + $0x20]]
        %v802 = vstv %s801
        %v803 = vmul.f32 %v802, %v749
        %v804 = vadd.f32 %v698, %v803
        %s805 = sld [smem:[#allocation2 + $0x51]]
        %v806 = vstv %s805
        %v807 = vmul.f32 %v806, %v768
        %v808 = vadd.f32 %v804, %v807
        %s809 = sld [smem:[#allocation2 + $0x21]]
        %v810 = vstv %s809
        %v811 = vmul.f32 %v810, %v749
        %v812 = vadd.f32 %v706, %v811
        %s813 = sld [smem:[#allocation2 + $0x52]]
        %v814 = vstv %s813
        %v815 = vmul.f32 %v814, %v768
        %v816 = vadd.f32 %v812, %v815
        %s817 = sld [smem:[#allocation2 + $0x22]]
        %v818 = vstv %s817
        %v819 = vmul.f32 %v818, %v749
        %v820 = vadd.f32 %v714, %v819
        %s821 = sld [smem:[#allocation2 + $0x53]]
        %v822 = vstv %s821
        %v823 = vmul.f32 %v822, %v768
        %v824 = vadd.f32 %v820, %v823
        %825 = vrot.lane.b32.xlu0 %v263, 96
        %v826 = vpop.permute.xlu0 %825
        %827 = vrot.lane.b32.xlu0 %v270, 96
        %v828 = vpop.permute.xlu0 %827
        %vm829 = vcmp.lt.s32.totalorder %v292, 96
        %v830 = vsel %vm829, %v826, %v828
        %v831 = vsel %vm829, %v828, %v826
        %832 = vrot.lane.b32.xlu0 %v285, 96
        %v833 = vpop.permute.xlu0 %832
        %834 = vrot.lane.b32.xlu0 %v286, 96
        %v835 = vpop.permute.xlu0 %834
        %v836 = vsel %vm829, %v833, %v835
        %v837 = vsel %vm829, %v835, %v833
        %s838 = scalar_lea.vmem [#allocation6], 5
        %v839 = vld [vmem:[%s838] ss:$8 sm:$0x3]
        %vm840 = vcmp.gt.f32.partialorder %v839, 0.5
        %v843 = vcombine.low %v830, %v831
        %v845 = vunpack.c.l.s4 1966171168
        %v846 = vunpack.c.0.s8 %v845
        %v847 = vlaneseq
        %v848 = vshrl.u32 %v847, 7
        %v849 = vsub.s32 %v846, %v848
        %v850 = vrot.slane %v843, %v849
        %v852 = vunpack.c.l.s4 1966171168
        %v853 = vunpack.c.0.s8 %v852
        %v854 = vlaneseq
        %v855 = vshrl.u32 %v854, 7
        %v856 = vsub.s32 %v853, %v855
        %v857 = vrot.slane %v850, %v856
        %v859 = vsel %vm840, %v857, 0.0
        %v862 = vcombine.low %v836, %v837
        %v864 = vunpack.c.l.s4 1966171168
        %v865 = vunpack.c.0.s8 %v864
        %v866 = vlaneseq
        %v867 = vshrl.u32 %v866, 7
        %v868 = vsub.s32 %v865, %v867
        %v869 = vrot.slane %v862, %v868
        %v871 = vunpack.c.l.s4 1966171168
        %v872 = vunpack.c.0.s8 %v871
        %v873 = vlaneseq
        %v874 = vshrl.u32 %v873, 7
        %v875 = vsub.s32 %v872, %v874
        %v876 = vrot.slane %v869, %v875
        %v878 = vsel %vm840, %v876, 0.0
        %s879 = sld [smem:[#allocation2 + $0x23]]
        %v880 = vstv %s879
        %v881 = vmul.f32 %v880, %v859
        %v882 = vadd.f32 %v776, %v881
        %s883 = sld [smem:[#allocation2 + $0x54]]
        %v884 = vstv %s883
        %v885 = vmul.f32 %v884, %v878
        %v886 = vadd.f32 %v882, %v885
        %s887 = sld [smem:[#allocation2 + $0x24]]
        %v888 = vstv %s887
        %v889 = vmul.f32 %v888, %v859
        %v890 = vadd.f32 %v784, %v889
        %s891 = sld [smem:[#allocation2 + $0x55]]
        %v892 = vstv %s891
        %v893 = vmul.f32 %v892, %v878
        %v894 = vadd.f32 %v890, %v893
        %s895 = sld [smem:[#allocation2 + $0x25]]
        %v896 = vstv %s895
        %v897 = vmul.f32 %v896, %v859
        %v898 = vadd.f32 %v792, %v897
        %s899 = sld [smem:[#allocation2 + $0x56]]
        %v900 = vstv %s899
        %v901 = vmul.f32 %v900, %v878
        %v902 = vadd.f32 %v898, %v901
        %s903 = sld [smem:[#allocation2 + $0x26]]
        %v904 = vstv %s903
        %v905 = vmul.f32 %v904, %v859
        %v906 = vadd.f32 %v800, %v905
        %s907 = sld [smem:[#allocation2 + $0x57]]
        %v908 = vstv %s907
        %v909 = vmul.f32 %v908, %v878
        %v910 = vadd.f32 %v906, %v909
        %s911 = sld [smem:[#allocation2 + $0x27]]
        %v912 = vstv %s911
        %v913 = vmul.f32 %v912, %v859
        %v914 = vadd.f32 %v808, %v913
        %s915 = sld [smem:[#allocation2 + $0x58]]
        %v916 = vstv %s915
        %v917 = vmul.f32 %v916, %v878
        %v918 = vadd.f32 %v914, %v917
        %s919 = sld [smem:[#allocation2 + $0x28]]
        %v920 = vstv %s919
        %v921 = vmul.f32 %v920, %v859
        %v922 = vadd.f32 %v816, %v921
        %s923 = sld [smem:[#allocation2 + $0x59]]
        %v924 = vstv %s923
        %v925 = vmul.f32 %v924, %v878
        %v926 = vadd.f32 %v922, %v925
        %s927 = sld [smem:[#allocation2 + $0x29]]
        %v928 = vstv %s927
        %v929 = vmul.f32 %v928, %v859
        %v930 = vadd.f32 %v824, %v929
        %s931 = sld [smem:[#allocation2 + $0x5a]]
        %v932 = vstv %s931
        %v933 = vmul.f32 %v932, %v878
        %v934 = vadd.f32 %v930, %v933
        %935 = vrot.lane.b32.xlu0 %v263, 80
        %v936 = vpop.permute.xlu0 %935
        %937 = vrot.lane.b32.xlu0 %v270, 80
        %v938 = vpop.permute.xlu0 %937
        %vm939 = vcmp.lt.s32.totalorder %v292, 80
        %v940 = vsel %vm939, %v936, %v938
        %v941 = vsel %vm939, %v938, %v936
        %942 = vrot.lane.b32.xlu0 %v285, 80
        %v943 = vpop.permute.xlu0 %942
        %944 = vrot.lane.b32.xlu0 %v286, 80
        %v945 = vpop.permute.xlu0 %944
        %v946 = vsel %vm939, %v943, %v945
        %v947 = vsel %vm939, %v945, %v943
        %s948 = scalar_lea.vmem [#allocation6], 6
        %v949 = vld [vmem:[%s948] ss:$8 sm:$0x3]
        %vm950 = vcmp.gt.f32.partialorder %v949, 0.5
        %v953 = vcombine.low %v940, %v941
        %v955 = vunpack.c.l.s4 1966171168
        %v956 = vunpack.c.0.s8 %v955
        %v957 = vlaneseq
        %v958 = vshrl.u32 %v957, 7
        %v959 = vsub.s32 %v956, %v958
        %v960 = vrot.slane %v953, %v959
        %v962 = vunpack.c.l.s4 1966171168
        %v963 = vunpack.c.0.s8 %v962
        %v964 = vlaneseq
        %v965 = vshrl.u32 %v964, 7
        %v966 = vsub.s32 %v963, %v965
        %v967 = vrot.slane %v960, %v966
        %v969 = vsel %vm950, %v967, 0.0
        %v972 = vcombine.low %v946, %v947
        %v974 = vunpack.c.l.s4 1966171168
        %v975 = vunpack.c.0.s8 %v974
        %v976 = vlaneseq
        %v977 = vshrl.u32 %v976, 7
        %v978 = vsub.s32 %v975, %v977
        %v979 = vrot.slane %v972, %v978
        %v981 = vunpack.c.l.s4 1966171168
        %v982 = vunpack.c.0.s8 %v981
        %v983 = vlaneseq
        %v984 = vshrl.u32 %v983, 7
        %v985 = vsub.s32 %v982, %v984
        %v986 = vrot.slane %v979, %v985
        %v988 = vsel %vm950, %v986, 0.0
        %s989 = sld [smem:[#allocation2 + $0x2a]]
        %v990 = vstv %s989
        %v991 = vmul.f32 %v990, %v969
        %v992 = vadd.f32 %v886, %v991
        %s993 = sld [smem:[#allocation2 + $0x5b]]
        %v994 = vstv %s993
        %v995 = vmul.f32 %v994, %v988
        %v996 = vadd.f32 %v992, %v995
        %s997 = sld [smem:[#allocation2 + $0x2b]]
        %v998 = vstv %s997
        %v999 = vmul.f32 %v998, %v969
        %v1000 = vadd.f32 %v894, %v999
        %s1001 = sld [smem:[#allocation2 + $0x5c]]
        %v1002 = vstv %s1001
        %v1003 = vmul.f32 %v1002, %v988
        %v1004 = vadd.f32 %v1000, %v1003
        %s1005 = sld [smem:[#allocation2 + $0x2c]]
        %v1006 = vstv %s1005
        %v1007 = vmul.f32 %v1006, %v969
        %v1008 = vadd.f32 %v902, %v1007
        %s1009 = sld [smem:[#allocation2 + $0x5d]]
        %v1010 = vstv %s1009
        %v1011 = vmul.f32 %v1010, %v988
        %v1012 = vadd.f32 %v1008, %v1011
        %s1013 = sld [smem:[#allocation2 + $0x2d]]
        %v1014 = vstv %s1013
        %v1015 = vmul.f32 %v1014, %v969
        %v1016 = vadd.f32 %v910, %v1015
        %s1017 = sld [smem:[#allocation2 + $0x5e]]
        %v1018 = vstv %s1017
        %v1019 = vmul.f32 %v1018, %v988
        %v1020 = vadd.f32 %v1016, %v1019
        %s1021 = sld [smem:[#allocation2 + $0x2e]]
        %v1022 = vstv %s1021
        %v1023 = vmul.f32 %v1022, %v969
        %v1024 = vadd.f32 %v918, %v1023
        %s1025 = sld [smem:[#allocation2 + $0x5f]]
        %v1026 = vstv %s1025
        %v1027 = vmul.f32 %v1026, %v988
        %v1028 = vadd.f32 %v1024, %v1027
        %s1029 = sld [smem:[#allocation2 + $0x2f]]
        %v1030 = vstv %s1029
        %v1031 = vmul.f32 %v1030, %v969
        %v1032 = vadd.f32 %v926, %v1031
        %s1033 = sld [smem:[#allocation2 + $0x60]]
        %v1034 = vstv %s1033
        %v1035 = vmul.f32 %v1034, %v988
        %v1036 = vadd.f32 %v1032, %v1035
        %s1037 = sld [smem:[#allocation2 + $0x30]]
        %v1038 = vstv %s1037
        %v1039 = vmul.f32 %v1038, %v969
        %v1040 = vadd.f32 %v934, %v1039
        %s1041 = sld [smem:[#allocation2 + $0x61]]
        %v1042 = vstv %s1041
        %v1043 = vmul.f32 %v1042, %v988
        %v1044 = vadd.f32 %v1040, %v1043
        %v1046 = vlaneseq
        %v1047 = vshrl.u32 %v1046, 7
        %v1048 = vsub.s32 0, %v1047
        %v1049 = vrot.slane %v996, %v1048
        %v1050 = vlaneseq
        %v1051 = vshrl.u32 %v1050, 7
        %v1052 = vsub.s32 1, %v1051
        %v1053 = vrot.slane %v996, %v1052
        %1056 = vrot.lane.b32.xlu0 %v1049, 3
        %v1057 = vpop.permute.xlu0 %1056
        %1058 = vrot.lane.b32.xlu0 %v1053, 3
        %v1059 = vpop.permute.xlu0 %1058
        %vm1060 = vcmp.lt.s32.totalorder %v292, 3
        %v1061 = vsel %vm1060, %v1057, %v1059
        %v1062 = vsel %vm1060, %v1059, %v1057
        %s1063 = scalar_lea.vmem [#allocation6], 7
        %v1064 = vld [vmem:[%s1063] ss:$8 sm:$0x3]
        %vm1065 = vcmp.gt.f32.partialorder %v1064, 0.5
        %v1068 = vcombine.low %v1062, %v1061
        %v1070 = vunpack.c.l.s4 1966171168
        %v1071 = vunpack.c.0.s8 %v1070
        %v1072 = vlaneseq
        %v1073 = vshrl.u32 %v1072, 7
        %v1074 = vsub.s32 %v1071, %v1073
        %v1075 = vrot.slane %v1068, %v1074
        %v1077 = vunpack.c.l.s4 1966171168
        %v1078 = vunpack.c.0.s8 %v1077
        %v1079 = vlaneseq
        %v1080 = vshrl.u32 %v1079, 7
        %v1081 = vsub.s32 %v1078, %v1080
        %v1082 = vrot.slane %v1075, %v1081
        %v1084 = vsel %vm1065, %v1082, 0.0
        %v1085 = vadd.f32 %v1084, 0.0
        %v1087 = vlaneseq
        %v1088 = vshrl.u32 %v1087, 7
        %v1089 = vsub.s32 0, %v1088
        %v1090 = vrot.slane %v1004, %v1089
        %v1091 = vlaneseq
        %v1092 = vshrl.u32 %v1091, 7
        %v1093 = vsub.s32 1, %v1092
        %v1094 = vrot.slane %v1004, %v1093
        %1097 = vrot.lane.b32.xlu0 %v1090, 2
        %v1098 = vpop.permute.xlu0 %1097
        %1099 = vrot.lane.b32.xlu0 %v1094, 2
        %v1100 = vpop.permute.xlu0 %1099
        %vm1101 = vcmp.lt.s32.totalorder %v292, 2
        %v1102 = vsel %vm1101, %v1098, %v1100
        %v1103 = vsel %vm1101, %v1100, %v1098
        %s1104 = scalar_lea.vmem [#allocation6], 16
        %v1105 = vld [vmem:[%s1104] ss:$8 sm:$0x3]
        %vm1106 = vcmp.gt.f32.partialorder %v1105, 0.5
        %v1109 = vcombine.low %v1103, %v1102
        %v1111 = vunpack.c.l.s4 1966171168
        %v1112 = vunpack.c.0.s8 %v1111
        %v1113 = vlaneseq
        %v1114 = vshrl.u32 %v1113, 7
        %v1115 = vsub.s32 %v1112, %v1114
        %v1116 = vrot.slane %v1109, %v1115
        %v1118 = vunpack.c.l.s4 1966171168
        %v1119 = vunpack.c.0.s8 %v1118
        %v1120 = vlaneseq
        %v1121 = vshrl.u32 %v1120, 7
        %v1122 = vsub.s32 %v1119, %v1121
        %v1123 = vrot.slane %v1116, %v1122
        %v1125 = vsel %vm1106, %v1123, 0.0
        %v1126 = vadd.f32 %v1085, %v1125
        %v1128 = vlaneseq
        %v1129 = vshrl.u32 %v1128, 7
        %v1130 = vsub.s32 0, %v1129
        %v1131 = vrot.slane %v1012, %v1130
        %v1132 = vlaneseq
        %v1133 = vshrl.u32 %v1132, 7
        %v1134 = vsub.s32 1, %v1133
        %v1135 = vrot.slane %v1012, %v1134
        %1138 = vrot.lane.b32.xlu0 %v1131, 1
        %v1139 = vpop.permute.xlu0 %1138
        %1140 = vrot.lane.b32.xlu0 %v1135, 1
        %v1141 = vpop.permute.xlu0 %1140
        %vm1142 = vcmp.lt.s32.totalorder %v292, 1
        %v1143 = vsel %vm1142, %v1139, %v1141
        %v1144 = vsel %vm1142, %v1141, %v1139
        %s1145 = scalar_lea.vmem [#allocation6], 17
        %v1146 = vld [vmem:[%s1145] ss:$8 sm:$0x3]
        %vm1147 = vcmp.gt.f32.partialorder %v1146, 0.5
        %v1150 = vcombine.low %v1144, %v1143
        %v1152 = vunpack.c.l.s4 1966171168
        %v1153 = vunpack.c.0.s8 %v1152
        %v1154 = vlaneseq
        %v1155 = vshrl.u32 %v1154, 7
        %v1156 = vsub.s32 %v1153, %v1155
        %v1157 = vrot.slane %v1150, %v1156
        %v1159 = vunpack.c.l.s4 1966171168
        %v1160 = vunpack.c.0.s8 %v1159
        %v1161 = vlaneseq
        %v1162 = vshrl.u32 %v1161, 7
        %v1163 = vsub.s32 %v1160, %v1162
        %v1164 = vrot.slane %v1157, %v1163
        %v1166 = vsel %vm1147, %v1164, 0.0
        %v1167 = vadd.f32 %v1126, %v1166
        %s1168 = scalar_lea.vmem [#allocation6], 18
        %v1169 = vld [vmem:[%s1168] ss:$8 sm:$0x3]
        %vm1170 = vcmp.gt.f32.partialorder %v1169, 0.5
        %v1171 = vsel %vm1170, %v1020, 0.0
        %v1172 = vadd.f32 %v1167, %v1171
        %v1174 = vlaneseq
        %v1175 = vshrl.u32 %v1174, 7
        %v1176 = vsub.s32 0, %v1175
        %v1177 = vrot.slane %v1028, %v1176
        %v1178 = vlaneseq
        %v1179 = vshrl.u32 %v1178, 7
        %v1180 = vsub.s32 1, %v1179
        %v1181 = vrot.slane %v1028, %v1180
        %1184 = vrot.lane.b32.xlu0 %v1177, 127
        %v1185 = vpop.permute.xlu0 %1184
        %1186 = vrot.lane.b32.xlu0 %v1181, 127
        %v1187 = vpop.permute.xlu0 %1186
        %vm1188 = vcmp.lt.s32.totalorder %v292, 127
        %v1189 = vsel %vm1188, %v1185, %v1187
        %v1190 = vsel %vm1188, %v1187, %v1185
        %s1191 = scalar_lea.vmem [#allocation6], 19
        %v1192 = vld [vmem:[%s1191] ss:$8 sm:$0x3]
        %vm1193 = vcmp.gt.f32.partialorder %v1192, 0.5
        %v1196 = vcombine.low %v1189, %v1190
        %v1198 = vunpack.c.l.s4 1966171168
        %v1199 = vunpack.c.0.s8 %v1198
        %v1200 = vlaneseq
        %v1201 = vshrl.u32 %v1200, 7
        %v1202 = vsub.s32 %v1199, %v1201
        %v1203 = vrot.slane %v1196, %v1202
        %v1205 = vunpack.c.l.s4 1966171168
        %v1206 = vunpack.c.0.s8 %v1205
        %v1207 = vlaneseq
        %v1208 = vshrl.u32 %v1207, 7
        %v1209 = vsub.s32 %v1206, %v1208
        %v1210 = vrot.slane %v1203, %v1209
        %v1212 = vsel %vm1193, %v1210, 0.0
        %v1213 = vadd.f32 %v1172, %v1212
        %v1215 = vlaneseq
        %v1216 = vshrl.u32 %v1215, 7
        %v1217 = vsub.s32 0, %v1216
        %v1218 = vrot.slane %v1036, %v1217
        %v1219 = vlaneseq
        %v1220 = vshrl.u32 %v1219, 7
        %v1221 = vsub.s32 1, %v1220
        %v1222 = vrot.slane %v1036, %v1221
        %1225 = vrot.lane.b32.xlu0 %v1218, 126
        %v1226 = vpop.permute.xlu0 %1225
        %1227 = vrot.lane.b32.xlu0 %v1222, 126
        %v1228 = vpop.permute.xlu0 %1227
        %vm1229 = vcmp.lt.s32.totalorder %v292, 126
        %v1230 = vsel %vm1229, %v1226, %v1228
        %v1231 = vsel %vm1229, %v1228, %v1226
        %s1232 = scalar_lea.vmem [#allocation6], 20
        %v1233 = vld [vmem:[%s1232] ss:$8 sm:$0x3]
        %vm1234 = vcmp.gt.f32.partialorder %v1233, 0.5
        %v1237 = vcombine.low %v1230, %v1231
        %v1239 = vunpack.c.l.s4 1966171168
        %v1240 = vunpack.c.0.s8 %v1239
        %v1241 = vlaneseq
        %v1242 = vshrl.u32 %v1241, 7
        %v1243 = vsub.s32 %v1240, %v1242
        %v1244 = vrot.slane %v1237, %v1243
        %v1246 = vunpack.c.l.s4 1966171168
        %v1247 = vunpack.c.0.s8 %v1246
        %v1248 = vlaneseq
        %v1249 = vshrl.u32 %v1248, 7
        %v1250 = vsub.s32 %v1247, %v1249
        %v1251 = vrot.slane %v1244, %v1250
        %v1253 = vsel %vm1234, %v1251, 0.0
        %v1254 = vadd.f32 %v1213, %v1253
        %v1256 = vlaneseq
        %v1257 = vshrl.u32 %v1256, 7
        %v1258 = vsub.s32 0, %v1257
        %v1259 = vrot.slane %v1044, %v1258
        %v1260 = vlaneseq
        %v1261 = vshrl.u32 %v1260, 7
        %v1262 = vsub.s32 1, %v1261
        %v1263 = vrot.slane %v1044, %v1262
        %1266 = vrot.lane.b32.xlu0 %v1259, 125
        %v1267 = vpop.permute.xlu0 %1266
        %1268 = vrot.lane.b32.xlu0 %v1263, 125
        %v1269 = vpop.permute.xlu0 %1268
        %vm1270 = vcmp.lt.s32.totalorder %v292, 125
        %v1271 = vsel %vm1270, %v1267, %v1269
        %v1272 = vsel %vm1270, %v1269, %v1267
        %s1273 = scalar_lea.vmem [#allocation6], 21
        %v1274 = vld [vmem:[%s1273] ss:$8 sm:$0x3]
        %vm1275 = vcmp.gt.f32.partialorder %v1274, 0.5
        %v1278 = vcombine.low %v1271, %v1272
        %v1280 = vunpack.c.l.s4 1966171168
        %v1281 = vunpack.c.0.s8 %v1280
        %v1282 = vlaneseq
        %v1283 = vshrl.u32 %v1282, 7
        %v1284 = vsub.s32 %v1281, %v1283
        %v1285 = vrot.slane %v1278, %v1284
        %v1287 = vunpack.c.l.s4 1966171168
        %v1288 = vunpack.c.0.s8 %v1287
        %v1289 = vlaneseq
        %v1290 = vshrl.u32 %v1289, 7
        %v1291 = vsub.s32 %v1288, %v1290
        %v1292 = vrot.slane %v1285, %v1291
        %v1294 = vsel %vm1275, %v1292, 0.0
        %v1295 = vadd.f32 %v1254, %v1294
        %s1296 = sld [smem:[#allocation2 + $0x62]]
        %v1297 = vstv %s1296
        %v1298 = vadd.f32 %v1295, %v1297
        %v1299 = vxor.u32 %v1298, 2147483648
        %v1300 = vmul.f32 %v1299, 1.442695
        %v1301 = vpow.pop %v1300
        %v1302 = vadd.f32 %v1301, 1.0
        %v1303 = vrcp.pop %v1302
        %v1304 = vmul.f32 1.0, %v1303
        %v1305 = vlaneseq
        %vm1306 = vcmp.ge.s32.totalorder %v1305, 0
        %vm1307 = vcmp.lt.s32.totalorder %v1305, 256
        %vm1308 = vmand %vm1306, %vm1307
        %1309 = vst.msk [vmem:[%s251] sm:$0x3] %vm1308, %v1304
        %v1310 = vld [vmem:[%s221] sm:$0xff]
        %v1312 = vlaneseq
        %v1313 = vshrl.u32 %v1312, 7
        %v1314 = vsub.s32 0, %v1313
        %v1315 = vrot.slane %v1304, %v1314
        %v1316 = vlaneseq
        %v1317 = vshrl.u32 %v1316, 7
        %v1318 = vsub.s32 1, %v1317
        %v1319 = vrot.slane %v1304, %v1318
        %v1320 = vcombine.low %v1315, %v1319
        %v1322 = vmul.f32 %v1310, %v1320
        %1323 = vst [vmem:[%s244] sm:$0xff] %v1322
        %s1324 = sand.u32 %s103, 1
        %s1325 = scalar_lea.sflag [#allocation4], %s1324
        %s1326 = sand.u32 %s103, 1
        %s1327 = smul.addr %s1326, 8
        %s1328 = scalar_lea.vmem [#allocation9], %s1327
        %s1329 = sand.u32 %s129, 1
        %s1330 = scalar_lea.sflag [#allocation11], %s1329
        %s1331 = sand.u32 %s129, 1
        %s1332 = smul.addr %s1331, 2
        %s1333 = scalar_lea.vmem [#allocation10], %s1332
        // Predicated region
        $region45: #{tpu_custom_call.1} parent=31 // pred_check
          %p1334 = pneg %p113
        $region46: #{tpu_custom_call.1} parent=31 // pred_check_branch
          %1336 = sbr.rel (%p1334) target = $region48
        $region47: #{tpu_custom_call.1} parent=31 // pred_region
          %s1338 = ssub.s32 128, 128
          %1339 = vsyncadd %s1325, %s1338
          %s1340 = smul.addr %s27, 2
          %s1341 = smul.addr %s1340, 64
          %s1342 = scalar_lea.hbm %s3, %s1341
          %s1344 = sshll.u32 %s1328, 4
          %s1345 = int_to_ptr.vmem [resolvable:$true] %s1344
          %1347 = dma.vmem_to_hbm [thread:$0]  %s1345, 128, %s1342, %s1325
        $region48: #{tpu_custom_call.1} parent=31 // pred_fallthru
          _
        // Predicated region
        $region49: #{tpu_custom_call.1} parent=31 // pred_check
          %p1348 = pneg %p139
        $region50: #{tpu_custom_call.1} parent=31 // pred_check_branch
          %1350 = sbr.rel (%p1348) target = $region52
        $region51: #{tpu_custom_call.1} parent=31 // pred_region
          %s1352 = ssub.s32 32, 32
          %1353 = vsyncadd %s1330, %s1352
          %s1354 = smul.addr %s27, 2
          %s1355 = smul.addr %s1354, 16
          %s1356 = scalar_lea.hbm %s4, %s1355
          %s1358 = sshll.u32 %s1333, 4
          %s1359 = int_to_ptr.vmem [resolvable:$true] %s1358
          %1361 = dma.vmem_to_hbm [thread:$0]  %s1359, 32, %s1356, %s1330
        $region52: #{tpu_custom_call.1} parent=31 // pred_fallthru
          _
      $region32: #{tpu_custom_call.1} parent=5 // pred_fallthru
        _
      %p1362 = scmp.le.s32.totalorder 2, %s22
      // Predicated region
      $region53: #{tpu_custom_call.1} parent=5 // pred_check
        %p1363 = pneg %p1362
      $region54: #{tpu_custom_call.1} parent=5 // pred_check_branch
        %1365 = sbr.rel (%p1363) target = $region56
      $region55: #{tpu_custom_call.1} parent=5 // pred_region
        %s1366 = ssub.s32 %s22, 2
        // Predicated region
        $region57: #{tpu_custom_call.1} parent=55 // pred_check
          %p1367 = pneg %p119
        $region58: #{tpu_custom_call.1} parent=55 // pred_check_branch
          %1369 = sbr.rel (%p1367) target = $region60
        $region59: #{tpu_custom_call.1} parent=55 // pred_region
          %s1370 = sand.u32 %s104, 1
          %s1371 = scalar_lea.sflag [#allocation4], %s1370
          %s1372 = sand.u32 %s104, 1
          %s1373 = smul.addr %s1372, 8
          %s1374 = scalar_lea.vmem [#allocation9], %s1373
          %1375 = dma.done %s1371, 128
        $region60: #{tpu_custom_call.1} parent=55 // pred_fallthru
          _
        // Predicated region
        $region61: #{tpu_custom_call.1} parent=55 // pred_check
          %p1376 = pneg %p145
        $region62: #{tpu_custom_call.1} parent=55 // pred_check_branch
          %1378 = sbr.rel (%p1376) target = $region64
        $region63: #{tpu_custom_call.1} parent=55 // pred_region
          %s1379 = sand.u32 %s130, 1
          %s1380 = scalar_lea.sflag [#allocation11], %s1379
          %s1381 = sand.u32 %s130, 1
          %s1382 = smul.addr %s1381, 2
          %s1383 = scalar_lea.vmem [#allocation10], %s1382
          %1384 = dma.done %s1380, 32
        $region64: #{tpu_custom_call.1} parent=55 // pred_fallthru
          _
      $region56: #{tpu_custom_call.1} parent=5 // pred_fallthru
        _
    $region6: #{tpu_custom_call.1} parent=1 // loop_footer
      %s26 = sadd.s32 1, %s22
    $region7: #{tpu_custom_call.1} parent=1 // loop_footer_branch
      %21 = sbr.rel target = $region3
    $region8: #{tpu_custom_call.1} parent=1 // loop_exit
      _
    %1385 = vsyncpa [#allocation3], 1
    %s1386 = scalar_lea.sflag [#allocation3], 1
    %1387 = vsyncpa %s1386, 1
    %1388 = vsyncpa [#allocation8], 1
    %s1389 = scalar_lea.sflag [#allocation8], 1
    %1390 = vsyncpa %s1389, 1
    %1391 = vsyncpa [#allocation4], 1
    %s1392 = scalar_lea.sflag [#allocation4], 1
    %1393 = vsyncpa %s1392, 1
    %1394 = vsyncpa [#allocation11], 1
    %s1395 = scalar_lea.sflag [#allocation11], 1
    %1396 = vsyncpa %s1395, 1
    %1397 = vsyncpa [#allocation5], 1
    %s1398 = scalar_lea.sflag [#allocation5], 1
    %1399 = vsyncpa %s1398, 1

</llo_original>
